<compile_context>
chip_gen: v7x
topology: tpu7x:2x2x1
jax: 0.10.0
libtpu: 0.0.40
codegen_flags: <defaults>
</compile_context>

<pallas_src>
import functools
import math

import jax
import jax.numpy as jnp
from jax.experimental import pallas as pl
from jax.experimental.pallas import tpu as pltpu


# ----------------------------- tiling helper -----------------------------

def _pick(dim, target, align):
    """Largest `align`-multiple tile that divides `dim` and is <= target, else the full dim.

    Falling back to the full dim keeps the (8,128)-divisible-or-full BlockSpec rule
    satisfied at small/odd sizes; at production sizes dims are align-multiples and
    get properly tiled (so weights/activations stream through VMEM double-buffered).
    """
    if dim <= target or dim % align != 0:
        return dim
    t = (target // align) * align
    while t >= align:
        if dim % t == 0:
            return t
        t -= align
    return dim


# ----------------------------- Pallas kernels -----------------------------

def _matmul_kernel(x_ref, w_ref, b_ref, *rest, activation, has_residual):
    """Tiled matmul: acc += x_tile @ w_tile; bias (+ReLU) (+residual) epilogue."""
    if has_residual:
        r_ref, o_ref, acc_ref = rest
    else:
        o_ref, acc_ref = rest

    @pl.when(pl.program_id(2) == 0)
    def _():
        acc_ref[...] = jnp.zeros_like(acc_ref)

    acc_ref[...] += jnp.dot(x_ref[...], w_ref[...],
                            preferred_element_type=jnp.float32)

    @pl.when(pl.program_id(2) == pl.num_programs(2) - 1)
    def _():
        y = acc_ref[...] + b_ref[...]
        if activation == "relu":
            y = jnp.maximum(y, 0.0)
        if has_residual:
            y = y + r_ref[...]
        o_ref[...] = y.astype(o_ref.dtype)


def linear(x, w, b, activation=None, residual=None, out_dtype=jnp.float32):
    """y = x @ w + b (+ReLU) (+residual).  x:[...,K]  w:[K,N]  b:[N]  residual:[...,N]."""
    *lead, K = x.shape
    N = w.shape[-1]
    M = math.prod(lead)
    x2 = x.reshape(M, K).astype(jnp.bfloat16)          # bf16 MXU operands,
    w2 = w.astype(jnp.bfloat16)                        # f32 accumulation
    b2 = b.reshape(1, N).astype(jnp.float32)

    tm = _pick(M, 256, 8)
    tn = _pick(N, 512, 128)
    tk = _pick(K, 512, 128)
    grid = (M // tm, N // tn, K // tk)

    in_specs = [
        pl.BlockSpec((tm, tk), lambda i, j, k: (i, k)),
        pl.BlockSpec((tk, tn), lambda i, j, k: (k, j)),
        pl.BlockSpec((1, tn), lambda i, j, k: (0, j)),
    ]
    args = [x2, w2, b2]
    if residual is not None:
        in_specs.append(pl.BlockSpec((tm, tn), lambda i, j, k: (i, j)))
        args.append(residual.reshape(M, N).astype(jnp.float32))

    out = pl.pallas_call(
        functools.partial(_matmul_kernel, activation=activation,
                          has_residual=residual is not None),
        out_shape=jax.ShapeDtypeStruct((M, N), out_dtype),
        grid=grid,
        in_specs=in_specs,
        out_specs=pl.BlockSpec((tm, tn), lambda i, j, k: (i, j)),
        scratch_shapes=[pltpu.VMEM((tm, tn), jnp.float32)],
        compiler_params=pltpu.CompilerParams(
            dimension_semantics=("parallel", "parallel", "arbitrary")),
    )(*args)
    return out.reshape(*lead, N)


def _ln_linear_kernel(x_ref, g_ref, bta_ref, w_ref, bias_ref, o_ref, *,
                      eps, activation):
    """LayerNorm(x) fused into the prologue of x_norm @ w + bias (+ReLU)."""
    x = x_ref[...].astype(jnp.float32)                     # [tm, D]
    d = x.shape[-1]
    mean = jnp.mean(x, axis=-1, keepdims=True)
    var = jnp.sum((x - mean) ** 2, axis=-1, keepdims=True) * (1.0 / (d - 1))
    inv = pl.reciprocal(jnp.sqrt(var) + eps, approx=True)  # EUP; VPU stays free
    xn = g_ref[...] * (x - mean) * inv + bta_ref[...]
    y = jnp.dot(xn.astype(w_ref.dtype), w_ref[...],
                preferred_element_type=jnp.float32)
    y = y + bias_ref[...]
    if activation == "relu":
        y = jnp.maximum(y, 0.0)
    o_ref[...] = y.astype(o_ref.dtype)


def ln_linear(x, gamma, beta, w, bias, activation=None,
              out_dtype=jnp.float32, eps=1e-6):
    """y = LayerNorm(x; gamma,beta) @ w + bias (+ReLU).  Full-D (un-tiled K) blocks."""
    *lead, D = x.shape
    N = w.shape[-1]
    M = math.prod(lead)
    x2 = x.reshape(M, D).astype(jnp.float32)

    tm = _pick(M, 256, 8)
    tn = _pick(N, 512, 128)
    grid = (M // tm, N // tn)

    out = pl.pallas_call(
        functools.partial(_ln_linear_kernel, eps=eps, activation=activation),
        out_shape=jax.ShapeDtypeStruct((M, N), out_dtype),
        grid=grid,
        in_specs=[
            pl.BlockSpec((tm, D), lambda i, j: (i, 0)),
            pl.BlockSpec((1, D), lambda i, j: (0, 0)),
            pl.BlockSpec((1, D), lambda i, j: (0, 0)),
            pl.BlockSpec((D, tn), lambda i, j: (0, j)),
            pl.BlockSpec((1, tn), lambda i, j: (0, j)),
        ],
        out_specs=pl.BlockSpec((tm, tn), lambda i, j: (i, j)),
        compiler_params=pltpu.CompilerParams(
            dimension_semantics=("parallel", "parallel")),
    )(x2, gamma.reshape(1, D), beta.reshape(1, D),
      w.astype(jnp.bfloat16), bias.reshape(1, N).astype(jnp.float32))
    return out.reshape(*lead, N)


def _layernorm_kernel(x_ref, g_ref, b_ref, o_ref, *, eps):
    x = x_ref[...]
    d = x.shape[-1]
    mean = jnp.mean(x, axis=-1, keepdims=True)
    var = jnp.sum((x - mean) ** 2, axis=-1, keepdims=True) * (1.0 / (d - 1))
    inv = pl.reciprocal(jnp.sqrt(var) + eps, approx=True)
    o_ref[...] = g_ref[...] * (x - mean) * inv + b_ref[...]


def layernorm(x, gamma, beta, eps=1e-6):
    *lead, D = x.shape
    M = math.prod(lead)
    x2 = x.reshape(M, D).astype(jnp.float32)
    tm = _pick(M, 512, 8)
    out = pl.pallas_call(
        functools.partial(_layernorm_kernel, eps=eps),
        out_shape=jax.ShapeDtypeStruct((M, D), jnp.float32),
        grid=(M // tm,),
        in_specs=[pl.BlockSpec((tm, D), lambda i: (i, 0)),
                  pl.BlockSpec((1, D), lambda i: (0, 0)),
                  pl.BlockSpec((1, D), lambda i: (0, 0))],
        out_specs=pl.BlockSpec((tm, D), lambda i: (i, 0)),
        compiler_params=pltpu.CompilerParams(dimension_semantics=("parallel",)),
    )(x2, gamma.reshape(1, D), beta.reshape(1, D))
    return out.reshape(*lead, D)


def _attention_kernel(q_ref, k_ref, v_ref, o_ref, *, heads):
    """Unmasked multi-head self-attention for one batch element.

    q/k/v blocks are (1, S, D); heads are split inside the kernel so the output
    block stays lane-dense (last dim = D) and no host-side head transposes are
    needed.  The 1/sqrt(d_head) scale is already folded into the Q projection.
    """
    q = q_ref[0]                                      # [S, D] (bf16)
    k = k_ref[0]
    v = v_ref[0]
    D = q.shape[-1]
    dh = D // heads
    outs = []
    for h in range(heads):
        lo = h * dh
        qh = q[:, lo:lo + dh]
        kh = k[:, lo:lo + dh]
        vh = v[:, lo:lo + dh]
        s = jax.lax.dot_general(qh, kh, (((1,), (1,)), ((), ())),
                                preferred_element_type=jnp.float32)   # [S, S]
        s = s - jnp.max(s, axis=-1, keepdims=True)
        p = jnp.exp(s)                                                # f32 softmax
        p = p * pl.reciprocal(jnp.sum(p, axis=-1, keepdims=True), approx=True)
        outs.append(jnp.dot(p.astype(v.dtype), vh,
                            preferred_element_type=jnp.float32))
    o_ref[0] = jnp.concatenate(outs, axis=-1).astype(o_ref.dtype)


def attention(q, k, v, *, heads):
    """q,k,v: [B, S, D] (already projected, q pre-scaled).  Returns [B, S, D] bf16."""
    B, S, D = q.shape
    return pl.pallas_call(
        functools.partial(_attention_kernel, heads=heads),
        out_shape=jax.ShapeDtypeStruct((B, S, D), jnp.bfloat16),
        grid=(B,),
        in_specs=[pl.BlockSpec((1, S, D), lambda b: (b, 0, 0)),
                  pl.BlockSpec((1, S, D), lambda b: (b, 0, 0)),
                  pl.BlockSpec((1, S, D), lambda b: (b, 0, 0))],
        out_specs=pl.BlockSpec((1, S, D), lambda b: (b, 0, 0)),
        compiler_params=pltpu.CompilerParams(dimension_semantics=("parallel",)),
    )(q, k, v)


# --------------------------- model building blocks ---------------------------

def encoder_layer(x, lp, heads):
    """Pre-norm encoder layer, mask=None, dropout=identity (eval)."""
    D = x.shape[-1]
    # norm_1 + fused QKV projection (scale folded into Wq).
    qkv = ln_linear(x, lp["n1_g"], lp["n1_b"], lp["w_qkv"], lp["b_qkv"],
                    out_dtype=jnp.bfloat16)                       # [B, S, 3D]
    q = qkv[..., :D]
    k = qkv[..., D:2 * D]
    v = qkv[..., 2 * D:]
    attn = attention(q, k, v, heads=heads)                        # [B, S, D]
    x = linear(attn, lp["wo"], lp["bo"], residual=x)              # x + attn_out
    # norm_2 + FF first layer (+ReLU) fused; second layer fuses the residual add.
    h = ln_linear(x, lp["n2_g"], lp["n2_b"], lp["w1"], lp["b1"],
                  activation="relu", out_dtype=jnp.bfloat16)      # [B, S, d_ff]
    x = linear(h, lp["w2"], lp["b2"], residual=x)                 # x + ff_out
    return x


def encoder_bottom_up_forward(params, src, spatial_src, *, heads):
    """EncoderBottomUp.forward: feat_embed(src) + loc_embed(spatial_src) -> layers -> norm."""
    loc = linear(spatial_src, params["loc_w"], params["loc_b"])   # SpatialEncoding
    x = linear(src, params["feat_w"], params["feat_b"],
               residual=loc)                                      # FeatureEmbedding + add
    for lp in params["layers"]:
        x = encoder_layer(x, lp, heads)
    return layernorm(x, params["norm_g"], params["norm_b"])


# ------------------------------ parameter init ------------------------------

class _ParamGen:
    """Deterministic xavier-uniform initializer."""

    def __init__(self, key):
        self._key = key
        self._n = 0

    def xavier(self, shape):
        self._n += 1
        k = jax.random.fold_in(self._key, self._n)
        fan_in, fan_out = shape[0], shape[-1]
        lim = math.sqrt(6.0 / (fan_in + fan_out))
        return jax.random.uniform(k, shape, jnp.float32, -lim, lim)

    @staticmethod
    def zeros(shape):
        return jnp.zeros(shape, jnp.float32)

    @staticmethod
    def ones(shape):
        return jnp.ones(shape, jnp.float32)


def _init_layer(gen, d, d_ff, heads):
    dh = d // heads
    scale = 1.0 / math.sqrt(dh)
    # Fused QKV weight [D, 3D]; fold the softmax scale into the Q part (bias is zero).
    w_qkv = jnp.concatenate(
        [gen.xavier((d, d)) * scale, gen.xavier((d, d)), gen.xavier((d, d))],
        axis=1)
    return {
        "n1_g": gen.ones((d,)), "n1_b": gen.zeros((d,)),
        "w_qkv": w_qkv.astype(jnp.bfloat16), "b_qkv": gen.zeros((3 * d,)),
        "wo": gen.xavier((d, d)).astype(jnp.bfloat16), "bo": gen.zeros((d,)),
        "n2_g": gen.ones((d,)), "n2_b": gen.zeros((d,)),
        "w1": gen.xavier((d, d_ff)).astype(jnp.bfloat16), "b1": gen.zeros((d_ff,)),
        "w2": gen.xavier((d_ff, d)).astype(jnp.bfloat16), "b2": gen.zeros((d,)),
    }


def init_params(gen, *, feat_dim, spatial_dim, d_model, d_ff, n_layers, heads):
    return {
        "feat_w": gen.xavier((feat_dim, d_model)).astype(jnp.bfloat16),
        "feat_b": gen.zeros((d_model,)),
        "loc_w": gen.xavier((spatial_dim, d_model)).astype(jnp.bfloat16),
        "loc_b": gen.zeros((d_model,)),
        "layers": [_init_layer(gen, d_model, d_ff, heads) for _ in range(n_layers)],
        "norm_g": gen.ones((d_model,)),
        "norm_b": gen.zeros((d_model,)),
    }


# ----------------------------------- main -----------------------------------

if __name__ == "__main__":
    B, S = 2, 16                       # batch, number of region features
    FEAT_DIM, SPATIAL_DIM = 64, 5      # detector feature dim, box-geometry dim
    D_MODEL, D_FF, HEADS, N_LAYERS = 32, 64, 4, 2

    root = jax.random.PRNGKey(0)
    pkey, skey, lkey = jax.random.split(root, 3)

    gen = _ParamGen(pkey)
    params = init_params(gen, feat_dim=FEAT_DIM, spatial_dim=SPATIAL_DIM,
                         d_model=D_MODEL, d_ff=D_FF, n_layers=N_LAYERS,
                         heads=HEADS)

    src = jax.random.normal(skey, (B, S, FEAT_DIM), jnp.float32)
    spatial_src = jax.random.normal(lkey, (B, S, SPATIAL_DIM), jnp.float32)

    fwd = jax.jit(functools.partial(encoder_bottom_up_forward, heads=HEADS))
    out = fwd(params, src, spatial_src)
    jax.block_until_ready(out)
    assert out.shape == (B, S, D_MODEL), out.shape
    print("KERNEL_OK")
</pallas_src>

<mosaic_0001>
module attributes {stable_mosaic.version = 11 : i64} {
  func.func @_matmul_kernel(%arg0: i32, %arg1: i32, %arg2: i32, %arg3: memref<32x5xbf16, #tpu.memory_space<vmem>>, %arg4: memref<5x32xbf16, #tpu.memory_space<vmem>>, %arg5: memref<1x32xf32, #tpu.memory_space<vmem>>, %arg6: memref<32x32xf32, #tpu.memory_space<vmem>>, %arg7: memref<32x32xf32, #tpu.memory_space<vmem>>) attributes {dimension_semantics = [#tpu.dimension_semantics<parallel>, #tpu.dimension_semantics<parallel>, #tpu.dimension_semantics<arbitrary>], iteration_bounds = array<i64: 1, 1, 1>, scalar_prefetch = 0 : i64, scratch_operands = 1 : i64, tpu.core_type = #tpu.core_type<tc>, window_params = [{transform_indices = @transform_0, window_bounds = array<i64: 32, 5>}, {transform_indices = @transform_1, window_bounds = array<i64: 5, 32>}, {transform_indices = @transform_2, window_bounds = array<i64: 1, 32>}, {transform_indices = @transform_3, window_bounds = array<i64: 32, 32>}]} {
    %c0_i32 = arith.constant 0 : i32
    %0 = arith.cmpi eq, %arg2, %c0_i32 : i32
    %1 = arith.extui %0 : i1 to i32
    %c0_i32_0 = arith.constant 0 : i32
    %2 = arith.cmpi ne, %1, %c0_i32_0 : i32
    scf.if %2 {
      %cst_10 = arith.constant 0.000000e+00 : f32
      %12 = vector.broadcast %cst_10 : f32 to vector<32x32xf32>
      %c0_11 = arith.constant 0 : index
      %c0_12 = arith.constant 0 : index
      %13 = vector.load %arg7[%c0_11, %c0_12] : memref<32x32xf32, #tpu.memory_space<vmem>>, vector<32x32xf32>
      tpu.vector_store %arg7[%c0_11, %c0_12], %12 {strides = array<i32>} : memref<32x32xf32, #tpu.memory_space<vmem>>, vector<32x32xf32>,
    } else {
    }
    %c0 = arith.constant 0 : index
    %c0_1 = arith.constant 0 : index
    %3 = vector.load %arg7[%c0, %c0_1] : memref<32x32xf32, #tpu.memory_space<vmem>>, vector<32x32xf32>
    %c0_2 = arith.constant 0 : index
    %c0_3 = arith.constant 0 : index
    %4 = vector.load %arg3[%c0_2, %c0_3] : memref<32x5xbf16, #tpu.memory_space<vmem>>, vector<32x5xbf16>
    %c0_4 = arith.constant 0 : index
    %c0_5 = arith.constant 0 : index
    %5 = vector.load %arg4[%c0_4, %c0_5] : memref<5x32xbf16, #tpu.memory_space<vmem>>, vector<5x32xbf16>
    %cst = arith.constant dense<0.000000e+00> : vector<32x32xf32>
    %6 = tpu.matmul %4, %5, %cst {dimension_numbers = #tpu.dot_dimension_numbers<[1], [0], [0], [1], [0, 0, 1, 1], [], []>} : vector<32x5xbf16>, vector<5x32xbf16>, vector<32x32xf32> -> vector<32x32xf32>
    %7 = arith.addf %3, %6 : vector<32x32xf32>
    %c0_6 = arith.constant 0 : index
    %c0_7 = arith.constant 0 : index
    %8 = vector.load %arg7[%c0_6, %c0_7] : memref<32x32xf32, #tpu.memory_space<vmem>>, vector<32x32xf32>
    tpu.vector_store %arg7[%c0_6, %c0_7], %7 {strides = array<i32>} : memref<32x32xf32, #tpu.memory_space<vmem>>, vector<32x32xf32>,
    %c0_i32_8 = arith.constant 0 : i32
    %9 = arith.cmpi eq, %arg2, %c0_i32_8 : i32
    %10 = arith.extui %9 : i1 to i32
    %c0_i32_9 = arith.constant 0 : i32
    %11 = arith.cmpi ne, %10, %c0_i32_9 : i32
    scf.if %11 {
      %c0_10 = arith.constant 0 : index
      %c0_11 = arith.constant 0 : index
      %12 = vector.load %arg7[%c0_10, %c0_11] : memref<32x32xf32, #tpu.memory_space<vmem>>, vector<32x32xf32>
      %c0_12 = arith.constant 0 : index
      %c0_13 = arith.constant 0 : index
      %13 = vector.load %arg5[%c0_12, %c0_13] : memref<1x32xf32, #tpu.memory_space<vmem>>, vector<1x32xf32>
      %14 = vector.broadcast %13 : vector<1x32xf32> to vector<32x32xf32>
      %15 = arith.addf %12, %14 : vector<32x32xf32>
      %c0_14 = arith.constant 0 : index
      %c0_15 = arith.constant 0 : index
      %16 = vector.load %arg6[%c0_14, %c0_15] : memref<32x32xf32, #tpu.memory_space<vmem>>, vector<32x32xf32>
      tpu.vector_store %arg6[%c0_14, %c0_15], %15 {strides = array<i32>} : memref<32x32xf32, #tpu.memory_space<vmem>>, vector<32x32xf32>,
    } else {
    }
    return
  }
  func.func @transform_0(%arg0: i32, %arg1: i32, %arg2: i32) -> (i32, i32) {
    %c0_i32 = arith.constant 0 : i32
    return %arg0, %arg2 : i32, i32
  }
  func.func @transform_1(%arg0: i32, %arg1: i32, %arg2: i32) -> (i32, i32) {
    %c0_i32 = arith.constant 0 : i32
    return %arg2, %arg1 : i32, i32
  }
  func.func @transform_2(%arg0: i32, %arg1: i32, %arg2: i32) -> (i32, i32) {
    %c0_i32 = arith.constant 0 : i32
    %c0_i32_0 = arith.constant 0 : i32
    return %c0_i32, %arg1 : i32, i32
  }
  func.func @transform_3(%arg0: i32, %arg1: i32, %arg2: i32) -> (i32, i32) {
    %c0_i32 = arith.constant 0 : i32
    return %arg0, %arg1 : i32, i32
  }
}

module attributes {stable_mosaic.version = 11 : i64} {
  func.func @_matmul_kernel(%arg0: i32, %arg1: i32, %arg2: i32, %arg3: memref<32x64xbf16, #tpu.memory_space<vmem>>, %arg4: memref<64x32xbf16, #tpu.memory_space<vmem>>, %arg5: memref<1x32xf32, #tpu.memory_space<vmem>>, %arg6: memref<32x32xf32, #tpu.memory_space<vmem>>, %arg7: memref<32x32xf32, #tpu.memory_space<vmem>>, %arg8: memref<32x32xf32, #tpu.memory_space<vmem>>) attributes {dimension_semantics = [#tpu.dimension_semantics<parallel>, #tpu.dimension_semantics<parallel>, #tpu.dimension_semantics<arbitrary>], iteration_bounds = array<i64: 1, 1, 1>, scalar_prefetch = 0 : i64, scratch_operands = 1 : i64, tpu.core_type = #tpu.core_type<tc>, window_params = [{transform_indices = @transform_0, window_bounds = array<i64: 32, 64>}, {transform_indices = @transform_1, window_bounds = array<i64: 64, 32>}, {transform_indices = @transform_2, window_bounds = array<i64: 1, 32>}, {transform_indices = @transform_3, window_bounds = array<i64: 32, 32>}, {transform_indices = @transform_4, window_bounds = array<i64: 32, 32>}]} {
    %c0_i32 = arith.constant 0 : i32
    %0 = arith.cmpi eq, %arg2, %c0_i32 : i32
    %1 = arith.extui %0 : i1 to i32
    %c0_i32_0 = arith.constant 0 : i32
    %2 = arith.cmpi ne, %1, %c0_i32_0 : i32
    scf.if %2 {
      %cst_10 = arith.constant 0.000000e+00 : f32
      %12 = vector.broadcast %cst_10 : f32 to vector<32x32xf32>
      %c0_11 = arith.constant 0 : index
      %c0_12 = arith.constant 0 : index
      %13 = vector.load %arg8[%c0_11, %c0_12] : memref<32x32xf32, #tpu.memory_space<vmem>>, vector<32x32xf32>
      tpu.vector_store %arg8[%c0_11, %c0_12], %12 {strides = array<i32>} : memref<32x32xf32, #tpu.memory_space<vmem>>, vector<32x32xf32>,
    } else {
    }
    %c0 = arith.constant 0 : index
    %c0_1 = arith.constant 0 : index
    %3 = vector.load %arg8[%c0, %c0_1] : memref<32x32xf32, #tpu.memory_space<vmem>>, vector<32x32xf32>
    %c0_2 = arith.constant 0 : index
    %c0_3 = arith.constant 0 : index
    %4 = vector.load %arg3[%c0_2, %c0_3] : memref<32x64xbf16, #tpu.memory_space<vmem>>, vector<32x64xbf16>
    %c0_4 = arith.constant 0 : index
    %c0_5 = arith.constant 0 : index
    %5 = vector.load %arg4[%c0_4, %c0_5] : memref<64x32xbf16, #tpu.memory_space<vmem>>, vector<64x32xbf16>
    %cst = arith.constant dense<0.000000e+00> : vector<32x32xf32>
    %6 = tpu.matmul %4, %5, %cst {dimension_numbers = #tpu.dot_dimension_numbers<[1], [0], [0], [1], [0, 0, 1, 1], [], []>} : vector<32x64xbf16>, vector<64x32xbf16>, vector<32x32xf32> -> vector<32x32xf32>
    %7 = arith.addf %3, %6 : vector<32x32xf32>
    %c0_6 = arith.constant 0 : index
    %c0_7 = arith.constant 0 : index
    %8 = vector.load %arg8[%c0_6, %c0_7] : memref<32x32xf32, #tpu.memory_space<vmem>>, vector<32x32xf32>
    tpu.vector_store %arg8[%c0_6, %c0_7], %7 {strides = array<i32>} : memref<32x32xf32, #tpu.memory_space<vmem>>, vector<32x32xf32>,
    %c0_i32_8 = arith.constant 0 : i32
    %9 = arith.cmpi eq, %arg2, %c0_i32_8 : i32
    %10 = arith.extui %9 : i1 to i32
    %c0_i32_9 = arith.constant 0 : i32
    %11 = arith.cmpi ne, %10, %c0_i32_9 : i32
    scf.if %11 {
      %c0_10 = arith.constant 0 : index
      %c0_11 = arith.constant 0 : index
      %12 = vector.load %arg8[%c0_10, %c0_11] : memref<32x32xf32, #tpu.memory_space<vmem>>, vector<32x32xf32>
      %c0_12 = arith.constant 0 : index
      %c0_13 = arith.constant 0 : index
      %13 = vector.load %arg5[%c0_12, %c0_13] : memref<1x32xf32, #tpu.memory_space<vmem>>, vector<1x32xf32>
      %14 = vector.broadcast %13 : vector<1x32xf32> to vector<32x32xf32>
      %15 = arith.addf %12, %14 : vector<32x32xf32>
      %c0_14 = arith.constant 0 : index
      %c0_15 = arith.constant 0 : index
      %16 = vector.load %arg6[%c0_14, %c0_15] : memref<32x32xf32, #tpu.memory_space<vmem>>, vector<32x32xf32>
      %17 = arith.addf %15, %16 : vector<32x32xf32>
      %c0_16 = arith.constant 0 : index
      %c0_17 = arith.constant 0 : index
      %18 = vector.load %arg7[%c0_16, %c0_17] : memref<32x32xf32, #tpu.memory_space<vmem>>, vector<32x32xf32>
      tpu.vector_store %arg7[%c0_16, %c0_17], %17 {strides = array<i32>} : memref<32x32xf32, #tpu.memory_space<vmem>>, vector<32x32xf32>,
    } else {
    }
    return
  }
  func.func @transform_0(%arg0: i32, %arg1: i32, %arg2: i32) -> (i32, i32) {
    %c0_i32 = arith.constant 0 : i32
    return %arg0, %arg2 : i32, i32
  }
  func.func @transform_1(%arg0: i32, %arg1: i32, %arg2: i32) -> (i32, i32) {
    %c0_i32 = arith.constant 0 : i32
    return %arg2, %arg1 : i32, i32
  }
  func.func @transform_2(%arg0: i32, %arg1: i32, %arg2: i32) -> (i32, i32) {
    %c0_i32 = arith.constant 0 : i32
    %c0_i32_0 = arith.constant 0 : i32
    return %c0_i32, %arg1 : i32, i32
  }
  func.func @transform_3(%arg0: i32, %arg1: i32, %arg2: i32) -> (i32, i32) {
    %c0_i32 = arith.constant 0 : i32
    return %arg0, %arg1 : i32, i32
  }
  func.func @transform_4(%arg0: i32, %arg1: i32, %arg2: i32) -> (i32, i32) {
    %c0_i32 = arith.constant 0 : i32
    return %arg0, %arg1 : i32, i32
  }
}

module attributes {stable_mosaic.version = 11 : i64} {
  func.func @_ln_linear_kernel(%arg0: i32, %arg1: i32, %arg2: memref<32x32xf32, #tpu.memory_space<vmem>>, %arg3: memref<1x32xf32, #tpu.memory_space<vmem>>, %arg4: memref<1x32xf32, #tpu.memory_space<vmem>>, %arg5: memref<32x96xbf16, #tpu.memory_space<vmem>>, %arg6: memref<1x96xf32, #tpu.memory_space<vmem>>, %arg7: memref<32x96xbf16, #tpu.memory_space<vmem>>) attributes {dimension_semantics = [#tpu.dimension_semantics<parallel>, #tpu.dimension_semantics<parallel>], iteration_bounds = array<i64: 1, 1>, scalar_prefetch = 0 : i64, scratch_operands = 0 : i64, tpu.core_type = #tpu.core_type<tc>, window_params = [{transform_indices = @transform_0, window_bounds = array<i64: 32, 32>}, {pipeline_mode = #tpu.pipeline_mode<synchronous>, transform_indices = @transform_1, window_bounds = array<i64: 1, 32>}, {pipeline_mode = #tpu.pipeline_mode<synchronous>, transform_indices = @transform_2, window_bounds = array<i64: 1, 32>}, {transform_indices = @transform_3, window_bounds = array<i64: 32, 96>}, {transform_indices = @transform_4, window_bounds = array<i64: 1, 96>}, {transform_indices = @transform_5, window_bounds = array<i64: 32, 96>}]} {
    %c0 = arith.constant 0 : index
    %c0_0 = arith.constant 0 : index
    %0 = vector.load %arg2[%c0, %c0_0] : memref<32x32xf32, #tpu.memory_space<vmem>>, vector<32x32xf32>
    %cst = arith.constant dense<0.000000e+00> : vector<32xf32>
    %1 = vector.multi_reduction <add>, %0, %cst [1] : vector<32x32xf32> to vector<32xf32>
    %2 = vector.shape_cast %1 : vector<32xf32> to vector<32x1xf32>
    %cst_1 = arith.constant 3.200000e+01 : f32
    %3 = vector.broadcast %cst_1 : f32 to vector<32x1xf32>
    %4 = arith.divf %2, %3 : vector<32x1xf32>
    %5 = vector.broadcast %4 : vector<32x1xf32> to vector<32x32xf32>
    %6 = arith.subf %0, %5 : vector<32x32xf32>
    %7 = arith.mulf %6, %6 : vector<32x32xf32>
    %cst_2 = arith.constant dense<0.000000e+00> : vector<32xf32>
    %8 = vector.multi_reduction <add>, %7, %cst_2 [1] : vector<32x32xf32> to vector<32xf32>
    %9 = vector.shape_cast %8 : vector<32xf32> to vector<32x1xf32>
    %cst_3 = arith.constant 0.0322580636 : f32
    %10 = vector.broadcast %cst_3 : f32 to vector<32x1xf32>
    %11 = arith.mulf %9, %10 : vector<32x1xf32>
    %12 = math.sqrt %11 : vector<32x1xf32>
    %cst_4 = arith.constant 9.99999997E-7 : f32
    %13 = vector.broadcast %cst_4 : f32 to vector<32x1xf32>
    %14 = arith.addf %12, %13 : vector<32x1xf32>
    %15 = tpu.reciprocal %14 {approx = true} : vector<32x1xf32> -> vector<32x1xf32>
    %c0_5 = arith.constant 0 : index
    %c0_6 = arith.constant 0 : index
    %16 = vector.load %arg3[%c0_5, %c0_6] : memref<1x32xf32, #tpu.memory_space<vmem>>, vector<1x32xf32>
    %17 = vector.broadcast %4 : vector<32x1xf32> to vector<32x32xf32>
    %18 = arith.subf %0, %17 : vector<32x32xf32>
    %19 = vector.broadcast %16 : vector<1x32xf32> to vector<32x32xf32>
    %20 = arith.mulf %19, %18 : vector<32x32xf32>
    %21 = vector.broadcast %15 : vector<32x1xf32> to vector<32x32xf32>
    %22 = arith.mulf %20, %21 : vector<32x32xf32>
    %c0_7 = arith.constant 0 : index
    %c0_8 = arith.constant 0 : index
    %23 = vector.load %arg4[%c0_7, %c0_8] : memref<1x32xf32, #tpu.memory_space<vmem>>, vector<1x32xf32>
    %24 = vector.broadcast %23 : vector<1x32xf32> to vector<32x32xf32>
    %25 = arith.addf %22, %24 : vector<32x32xf32>
    %26 = arith.truncf %25 : vector<32x32xf32> to vector<32x32xbf16>
    %c0_9 = arith.constant 0 : index
    %c0_10 = arith.constant 0 : index
    %27 = vector.load %arg5[%c0_9, %c0_10] : memref<32x96xbf16, #tpu.memory_space<vmem>>, vector<32x96xbf16>
    %cst_11 = arith.constant dense<0.000000e+00> : vector<32x96xf32>
    %28 = tpu.matmul %26, %27, %cst_11 {dimension_numbers = #tpu.dot_dimension_numbers<[1], [0], [0], [1], [0, 0, 1, 1], [], []>} : vector<32x32xbf16>, vector<32x96xbf16>, vector<32x96xf32> -> vector<32x96xf32>
    %c0_12 = arith.constant 0 : index
    %c0_13 = arith.constant 0 : index
    %29 = vector.load %arg6[%c0_12, %c0_13] : memref<1x96xf32, #tpu.memory_space<vmem>>, vector<1x96xf32>
    %30 = vector.broadcast %29 : vector<1x96xf32> to vector<32x96xf32>
    %31 = arith.addf %28, %30 : vector<32x96xf32>
    %32 = arith.truncf %31 : vector<32x96xf32> to vector<32x96xbf16>
    %c0_14 = arith.constant 0 : index
    %c0_15 = arith.constant 0 : index
    %33 = vector.load %arg7[%c0_14, %c0_15] : memref<32x96xbf16, #tpu.memory_space<vmem>>, vector<32x96xbf16>
    tpu.vector_store %arg7[%c0_14, %c0_15], %32 {strides = array<i32>} : memref<32x96xbf16, #tpu.memory_space<vmem>>, vector<32x96xbf16>,
    return
  }
  func.func @transform_0(%arg0: i32, %arg1: i32) -> (i32, i32) {
    %c0_i32 = arith.constant 0 : i32
    %c0_i32_0 = arith.constant 0 : i32
    return %arg0, %c0_i32 : i32, i32
  }
  func.func @transform_1(%arg0: i32, %arg1: i32) -> (i32, i32) {
    %c0_i32 = arith.constant 0 : i32
    %c0_i32_0 = arith.constant 0 : i32
    %c0_i32_1 = arith.constant 0 : i32
    return %c0_i32, %c0_i32_0 : i32, i32
  }
  func.func @transform_2(%arg0: i32, %arg1: i32) -> (i32, i32) {
    %c0_i32 = arith.constant 0 : i32
    %c0_i32_0 = arith.constant 0 : i32
    %c0_i32_1 = arith.constant 0 : i32
    return %c0_i32, %c0_i32_0 : i32, i32
  }
  func.func @transform_3(%arg0: i32, %arg1: i32) -> (i32, i32) {
    %c0_i32 = arith.constant 0 : i32
    %c0_i32_0 = arith.constant 0 : i32
    return %c0_i32, %arg1 : i32, i32
  }
  func.func @transform_4(%arg0: i32, %arg1: i32) -> (i32, i32) {
    %c0_i32 = arith.constant 0 : i32
    %c0_i32_0 = arith.constant 0 : i32
    return %c0_i32, %arg1 : i32, i32
  }
  func.func @transform_5(%arg0: i32, %arg1: i32) -> (i32, i32) {
    %c0_i32 = arith.constant 0 : i32
    return %arg0, %arg1 : i32, i32
  }
}

module attributes {stable_mosaic.version = 11 : i64} {
  func.func @_attention_kernel(%arg0: i32, %arg1: memref<1x16x32xbf16, #tpu.memory_space<vmem>>, %arg2: memref<1x16x32xbf16, #tpu.memory_space<vmem>>, %arg3: memref<1x16x32xbf16, #tpu.memory_space<vmem>>, %arg4: memref<1x16x32xbf16, #tpu.memory_space<vmem>>) attributes {dimension_semantics = [#tpu.dimension_semantics<parallel>], iteration_bounds = array<i64: 2>, scalar_prefetch = 0 : i64, scratch_operands = 0 : i64, tpu.core_type = #tpu.core_type<tc>, window_params = [{transform_indices = @transform_0, window_bounds = array<i64: 1, 16, 32>}, {transform_indices = @transform_1, window_bounds = array<i64: 1, 16, 32>}, {transform_indices = @transform_2, window_bounds = array<i64: 1, 16, 32>}, {transform_indices = @transform_3, window_bounds = array<i64: 1, 16, 32>}]} {
    %c0 = arith.constant 0 : index
    %c0_0 = arith.constant 0 : index
    %c0_1 = arith.constant 0 : index
    %0 = vector.load %arg1[%c0, %c0_0, %c0_1] : memref<1x16x32xbf16, #tpu.memory_space<vmem>>, vector<1x16x32xbf16>
    %1 = vector.shape_cast %0 : vector<1x16x32xbf16> to vector<16x32xbf16>
    %c0_2 = arith.constant 0 : index
    %c0_3 = arith.constant 0 : index
    %c0_4 = arith.constant 0 : index
    %2 = vector.load %arg2[%c0_2, %c0_3, %c0_4] : memref<1x16x32xbf16, #tpu.memory_space<vmem>>, vector<1x16x32xbf16>
    %3 = vector.shape_cast %2 : vector<1x16x32xbf16> to vector<16x32xbf16>
    %c0_5 = arith.constant 0 : index
    %c0_6 = arith.constant 0 : index
    %c0_7 = arith.constant 0 : index
    %4 = vector.load %arg3[%c0_5, %c0_6, %c0_7] : memref<1x16x32xbf16, #tpu.memory_space<vmem>>, vector<1x16x32xbf16>
    %5 = vector.shape_cast %4 : vector<1x16x32xbf16> to vector<16x32xbf16>
    %6 = vector.extract_strided_slice %1 {offsets = [0, 0], sizes = [16, 8], strides = [1, 1]} : vector<16x32xbf16> to vector<16x8xbf16>
    %7 = vector.extract_strided_slice %3 {offsets = [0, 0], sizes = [16, 8], strides = [1, 1]} : vector<16x32xbf16> to vector<16x8xbf16>
    %8 = vector.extract_strided_slice %5 {offsets = [0, 0], sizes = [16, 8], strides = [1, 1]} : vector<16x32xbf16> to vector<16x8xbf16>
    %cst = arith.constant dense<0.000000e+00> : vector<16x16xf32>
    %9 = tpu.matmul %6, %7, %cst {dimension_numbers = #tpu.dot_dimension_numbers<[1], [1], [0], [0], [0, 0, 1, 0], [], []>} : vector<16x8xbf16>, vector<16x8xbf16>, vector<16x16xf32> -> vector<16x16xf32>
    %cst_8 = arith.constant dense<0xFF800000> : vector<16xf32>
    %10 = vector.multi_reduction <maximumf>, %9, %cst_8 [1] : vector<16x16xf32> to vector<16xf32>
    %11 = vector.shape_cast %10 : vector<16xf32> to vector<16x1xf32>
    %12 = vector.broadcast %11 : vector<16x1xf32> to vector<16x16xf32>
    %13 = arith.subf %9, %12 : vector<16x16xf32>
    %14 = math.exp %13 : vector<16x16xf32>
    %cst_9 = arith.constant dense<0.000000e+00> : vector<16xf32>
    %15 = vector.multi_reduction <add>, %14, %cst_9 [1] : vector<16x16xf32> to vector<16xf32>
    %16 = vector.shape_cast %15 : vector<16xf32> to vector<16x1xf32>
    %17 = tpu.reciprocal %16 {approx = true} : vector<16x1xf32> -> vector<16x1xf32>
    %18 = vector.broadcast %17 : vector<16x1xf32> to vector<16x16xf32>
    %19 = arith.mulf %14, %18 : vector<16x16xf32>
    %20 = arith.truncf %19 : vector<16x16xf32> to vector<16x16xbf16>
    %cst_10 = arith.constant dense<0.000000e+00> : vector<16x8xf32>
    %21 = tpu.matmul %20, %8, %cst_10 {dimension_numbers = #tpu.dot_dimension_numbers<[1], [0], [0], [1], [0, 0, 1, 1], [], []>} : vector<16x16xbf16>, vector<16x8xbf16>, vector<16x8xf32> -> vector<16x8xf32>
    %22 = vector.extract_strided_slice %1 {offsets = [0, 8], sizes = [16, 8], strides = [1, 1]} : vector<16x32xbf16> to vector<16x8xbf16>
    %23 = vector.extract_strided_slice %3 {offsets = [0, 8], sizes = [16, 8], strides = [1, 1]} : vector<16x32xbf16> to vector<16x8xbf16>
    %24 = vector.extract_strided_slice %5 {offsets = [0, 8], sizes = [16, 8], strides = [1, 1]} : vector<16x32xbf16> to vector<16x8xbf16>
    %cst_11 = arith.constant dense<0.000000e+00> : vector<16x16xf32>
    %25 = tpu.matmul %22, %23, %cst_11 {dimension_numbers = #tpu.dot_dimension_numbers<[1], [1], [0], [0], [0, 0, 1, 0], [], []>} : vector<16x8xbf16>, vector<16x8xbf16>, vector<16x16xf32> -> vector<16x16xf32>
    %cst_12 = arith.constant dense<0xFF800000> : vector<16xf32>
    %26 = vector.multi_reduction <maximumf>, %25, %cst_12 [1] : vector<16x16xf32> to vector<16xf32>
    %27 = vector.shape_cast %26 : vector<16xf32> to vector<16x1xf32>
    %28 = vector.broadcast %27 : vector<16x1xf32> to vector<16x16xf32>
    %29 = arith.subf %25, %28 : vector<16x16xf32>
    %30 = math.exp %29 : vector<16x16xf32>
    %cst_13 = arith.constant dense<0.000000e+00> : vector<16xf32>
    %31 = vector.multi_reduction <add>, %30, %cst_13 [1] : vector<16x16xf32> to vector<16xf32>
    %32 = vector.shape_cast %31 : vector<16xf32> to vector<16x1xf32>
    %33 = tpu.reciprocal %32 {approx = true} : vector<16x1xf32> -> vector<16x1xf32>
    %34 = vector.broadcast %33 : vector<16x1xf32> to vector<16x16xf32>
    %35 = arith.mulf %30, %34 : vector<16x16xf32>
    %36 = arith.truncf %35 : vector<16x16xf32> to vector<16x16xbf16>
    %cst_14 = arith.constant dense<0.000000e+00> : vector<16x8xf32>
    %37 = tpu.matmul %36, %24, %cst_14 {dimension_numbers = #tpu.dot_dimension_numbers<[1], [0], [0], [1], [0, 0, 1, 1], [], []>} : vector<16x16xbf16>, vector<16x8xbf16>, vector<16x8xf32> -> vector<16x8xf32>
    %38 = vector.extract_strided_slice %1 {offsets = [0, 16], sizes = [16, 8], strides = [1, 1]} : vector<16x32xbf16> to vector<16x8xbf16>
    %39 = vector.extract_strided_slice %3 {offsets = [0, 16], sizes = [16, 8], strides = [1, 1]} : vector<16x32xbf16> to vector<16x8xbf16>
    %40 = vector.extract_strided_slice %5 {offsets = [0, 16], sizes = [16, 8], strides = [1, 1]} : vector<16x32xbf16> to vector<16x8xbf16>
    %cst_15 = arith.constant dense<0.000000e+00> : vector<16x16xf32>
    %41 = tpu.matmul %38, %39, %cst_15 {dimension_numbers = #tpu.dot_dimension_numbers<[1], [1], [0], [0], [0, 0, 1, 0], [], []>} : vector<16x8xbf16>, vector<16x8xbf16>, vector<16x16xf32> -> vector<16x16xf32>
    %cst_16 = arith.constant dense<0xFF800000> : vector<16xf32>
    %42 = vector.multi_reduction <maximumf>, %41, %cst_16 [1] : vector<16x16xf32> to vector<16xf32>
    %43 = vector.shape_cast %42 : vector<16xf32> to vector<16x1xf32>
    %44 = vector.broadcast %43 : vector<16x1xf32> to vector<16x16xf32>
    %45 = arith.subf %41, %44 : vector<16x16xf32>
    %46 = math.exp %45 : vector<16x16xf32>
    %cst_17 = arith.constant dense<0.000000e+00> : vector<16xf32>
    %47 = vector.multi_reduction <add>, %46, %cst_17 [1] : vector<16x16xf32> to vector<16xf32>
    %48 = vector.shape_cast %47 : vector<16xf32> to vector<16x1xf32>
    %49 = tpu.reciprocal %48 {approx = true} : vector<16x1xf32> -> vector<16x1xf32>
    %50 = vector.broadcast %49 : vector<16x1xf32> to vector<16x16xf32>
    %51 = arith.mulf %46, %50 : vector<16x16xf32>
    %52 = arith.truncf %51 : vector<16x16xf32> to vector<16x16xbf16>
    %cst_18 = arith.constant dense<0.000000e+00> : vector<16x8xf32>
    %53 = tpu.matmul %52, %40, %cst_18 {dimension_numbers = #tpu.dot_dimension_numbers<[1], [0], [0], [1], [0, 0, 1, 1], [], []>} : vector<16x16xbf16>, vector<16x8xbf16>, vector<16x8xf32> -> vector<16x8xf32>
    %54 = vector.extract_strided_slice %1 {offsets = [0, 24], sizes = [16, 8], strides = [1, 1]} : vector<16x32xbf16> to vector<16x8xbf16>
    %55 = vector.extract_strided_slice %3 {offsets = [0, 24], sizes = [16, 8], strides = [1, 1]} : vector<16x32xbf16> to vector<16x8xbf16>
    %56 = vector.extract_strided_slice %5 {offsets = [0, 24], sizes = [16, 8], strides = [1, 1]} : vector<16x32xbf16> to vector<16x8xbf16>
    %cst_19 = arith.constant dense<0.000000e+00> : vector<16x16xf32>
    %57 = tpu.matmul %54, %55, %cst_19 {dimension_numbers = #tpu.dot_dimension_numbers<[1], [1], [0], [0], [0, 0, 1, 0], [], []>} : vector<16x8xbf16>, vector<16x8xbf16>, vector<16x16xf32> -> vector<16x16xf32>
    %cst_20 = arith.constant dense<0xFF800000> : vector<16xf32>
    %58 = vector.multi_reduction <maximumf>, %57, %cst_20 [1] : vector<16x16xf32> to vector<16xf32>
    %59 = vector.shape_cast %58 : vector<16xf32> to vector<16x1xf32>
    %60 = vector.broadcast %59 : vector<16x1xf32> to vector<16x16xf32>
    %61 = arith.subf %57, %60 : vector<16x16xf32>
    %62 = math.exp %61 : vector<16x16xf32>
    %cst_21 = arith.constant dense<0.000000e+00> : vector<16xf32>
    %63 = vector.multi_reduction <add>, %62, %cst_21 [1] : vector<16x16xf32> to vector<16xf32>
    %64 = vector.shape_cast %63 : vector<16xf32> to vector<16x1xf32>
    %65 = tpu.reciprocal %64 {approx = true} : vector<16x1xf32> -> vector<16x1xf32>
    %66 = vector.broadcast %65 : vector<16x1xf32> to vector<16x16xf32>
    %67 = arith.mulf %62, %66 : vector<16x16xf32>
    %68 = arith.truncf %67 : vector<16x16xf32> to vector<16x16xbf16>
    %cst_22 = arith.constant dense<0.000000e+00> : vector<16x8xf32>
    %69 = tpu.matmul %68, %56, %cst_22 {dimension_numbers = #tpu.dot_dimension_numbers<[1], [0], [0], [1], [0, 0, 1, 1], [], []>} : vector<16x16xbf16>, vector<16x8xbf16>, vector<16x8xf32> -> vector<16x8xf32>
    %70 = tpu.concatenate %21, %37, %53, %69 in 1 : vector<16x8xf32>, vector<16x8xf32>, vector<16x8xf32>, vector<16x8xf32> -> vector<16x32xf32>
    %71 = arith.truncf %70 : vector<16x32xf32> to vector<16x32xbf16>
    %c0_23 = arith.constant 0 : index
    %c0_24 = arith.constant 0 : index
    %c0_25 = arith.constant 0 : index
    %72 = vector.load %arg4[%c0_23, %c0_24, %c0_25] : memref<1x16x32xbf16, #tpu.memory_space<vmem>>, vector<1x16x32xbf16>
    %73 = vector.shape_cast %72 : vector<1x16x32xbf16> to vector<16x32xbf16>
    %74 = vector.shape_cast %71 : vector<16x32xbf16> to vector<1x16x32xbf16>
    tpu.vector_store %arg4[%c0_23, %c0_24, %c0_25], %74 {strides = array<i32>} : memref<1x16x32xbf16, #tpu.memory_space<vmem>>, vector<1x16x32xbf16>,
    return
  }
  func.func @transform_0(%arg0: i32) -> (i32, i32, i32) {
    %c0_i32 = arith.constant 0 : i32
    %c0_i32_0 = arith.constant 0 : i32
    %c0_i32_1 = arith.constant 0 : i32
    return %arg0, %c0_i32, %c0_i32_0 : i32, i32, i32
  }
  func.func @transform_1(%arg0: i32) -> (i32, i32, i32) {
    %c0_i32 = arith.constant 0 : i32
    %c0_i32_0 = arith.constant 0 : i32
    %c0_i32_1 = arith.constant 0 : i32
    return %arg0, %c0_i32, %c0_i32_0 : i32, i32, i32
  }
  func.func @transform_2(%arg0: i32) -> (i32, i32, i32) {
    %c0_i32 = arith.constant 0 : i32
    %c0_i32_0 = arith.constant 0 : i32
    %c0_i32_1 = arith.constant 0 : i32
    return %arg0, %c0_i32, %c0_i32_0 : i32, i32, i32
  }
  func.func @transform_3(%arg0: i32) -> (i32, i32, i32) {
    %c0_i32 = arith.constant 0 : i32
    %c0_i32_0 = arith.constant 0 : i32
    %c0_i32_1 = arith.constant 0 : i32
    return %arg0, %c0_i32, %c0_i32_0 : i32, i32, i32
  }
}

module attributes {stable_mosaic.version = 11 : i64} {
  func.func @_matmul_kernel(%arg0: i32, %arg1: i32, %arg2: i32, %arg3: memref<32x32xbf16, #tpu.memory_space<vmem>>, %arg4: memref<32x32xbf16, #tpu.memory_space<vmem>>, %arg5: memref<1x32xf32, #tpu.memory_space<vmem>>, %arg6: memref<32x32xf32, #tpu.memory_space<vmem>>, %arg7: memref<32x32xf32, #tpu.memory_space<vmem>>, %arg8: memref<32x32xf32, #tpu.memory_space<vmem>>) attributes {dimension_semantics = [#tpu.dimension_semantics<parallel>, #tpu.dimension_semantics<parallel>, #tpu.dimension_semantics<arbitrary>], iteration_bounds = array<i64: 1, 1, 1>, scalar_prefetch = 0 : i64, scratch_operands = 1 : i64, tpu.core_type = #tpu.core_type<tc>, window_params = [{transform_indices = @transform_0, window_bounds = array<i64: 32, 32>}, {transform_indices = @transform_1, window_bounds = array<i64: 32, 32>}, {transform_indices = @transform_2, window_bounds = array<i64: 1, 32>}, {transform_indices = @transform_3, window_bounds = array<i64: 32, 32>}, {transform_indices = @transform_4, window_bounds = array<i64: 32, 32>}]} {
    %c0_i32 = arith.constant 0 : i32
    %0 = arith.cmpi eq, %arg2, %c0_i32 : i32
    %1 = arith.extui %0 : i1 to i32
    %c0_i32_0 = arith.constant 0 : i32
    %2 = arith.cmpi ne, %1, %c0_i32_0 : i32
    scf.if %2 {
      %cst_10 = arith.constant 0.000000e+00 : f32
      %12 = vector.broadcast %cst_10 : f32 to vector<32x32xf32>
      %c0_11 = arith.constant 0 : index
      %c0_12 = arith.constant 0 : index
      %13 = vector.load %arg8[%c0_11, %c0_12] : memref<32x32xf32, #tpu.memory_space<vmem>>, vector<32x32xf32>
      tpu.vector_store %arg8[%c0_11, %c0_12], %12 {strides = array<i32>} : memref<32x32xf32, #tpu.memory_space<vmem>>, vector<32x32xf32>,
    } else {
    }
    %c0 = arith.constant 0 : index
    %c0_1 = arith.constant 0 : index
    %3 = vector.load %arg8[%c0, %c0_1] : memref<32x32xf32, #tpu.memory_space<vmem>>, vector<32x32xf32>
    %c0_2 = arith.constant 0 : index
    %c0_3 = arith.constant 0 : index
    %4 = vector.load %arg3[%c0_2, %c0_3] : memref<32x32xbf16, #tpu.memory_space<vmem>>, vector<32x32xbf16>
    %c0_4 = arith.constant 0 : index
    %c0_5 = arith.constant 0 : index
    %5 = vector.load %arg4[%c0_4, %c0_5] : memref<32x32xbf16, #tpu.memory_space<vmem>>, vector<32x32xbf16>
    %cst = arith.constant dense<0.000000e+00> : vector<32x32xf32>
    %6 = tpu.matmul %4, %5, %cst {dimension_numbers = #tpu.dot_dimension_numbers<[1], [0], [0], [1], [0, 0, 1, 1], [], []>} : vector<32x32xbf16>, vector<32x32xbf16>, vector<32x32xf32> -> vector<32x32xf32>
    %7 = arith.addf %3, %6 : vector<32x32xf32>
    %c0_6 = arith.constant 0 : index
    %c0_7 = arith.constant 0 : index
    %8 = vector.load %arg8[%c0_6, %c0_7] : memref<32x32xf32, #tpu.memory_space<vmem>>, vector<32x32xf32>
    tpu.vector_store %arg8[%c0_6, %c0_7], %7 {strides = array<i32>} : memref<32x32xf32, #tpu.memory_space<vmem>>, vector<32x32xf32>,
    %c0_i32_8 = arith.constant 0 : i32
    %9 = arith.cmpi eq, %arg2, %c0_i32_8 : i32
    %10 = arith.extui %9 : i1 to i32
    %c0_i32_9 = arith.constant 0 : i32
    %11 = arith.cmpi ne, %10, %c0_i32_9 : i32
    scf.if %11 {
      %c0_10 = arith.constant 0 : index
      %c0_11 = arith.constant 0 : index
      %12 = vector.load %arg8[%c0_10, %c0_11] : memref<32x32xf32, #tpu.memory_space<vmem>>, vector<32x32xf32>
      %c0_12 = arith.constant 0 : index
      %c0_13 = arith.constant 0 : index
      %13 = vector.load %arg5[%c0_12, %c0_13] : memref<1x32xf32, #tpu.memory_space<vmem>>, vector<1x32xf32>
      %14 = vector.broadcast %13 : vector<1x32xf32> to vector<32x32xf32>
      %15 = arith.addf %12, %14 : vector<32x32xf32>
      %c0_14 = arith.constant 0 : index
      %c0_15 = arith.constant 0 : index
      %16 = vector.load %arg6[%c0_14, %c0_15] : memref<32x32xf32, #tpu.memory_space<vmem>>, vector<32x32xf32>
      %17 = arith.addf %15, %16 : vector<32x32xf32>
      %c0_16 = arith.constant 0 : index
      %c0_17 = arith.constant 0 : index
      %18 = vector.load %arg7[%c0_16, %c0_17] : memref<32x32xf32, #tpu.memory_space<vmem>>, vector<32x32xf32>
      tpu.vector_store %arg7[%c0_16, %c0_17], %17 {strides = array<i32>} : memref<32x32xf32, #tpu.memory_space<vmem>>, vector<32x32xf32>,
    } else {
    }
    return
  }
  func.func @transform_0(%arg0: i32, %arg1: i32, %arg2: i32) -> (i32, i32) {
    %c0_i32 = arith.constant 0 : i32
    return %arg0, %arg2 : i32, i32
  }
  func.func @transform_1(%arg0: i32, %arg1: i32, %arg2: i32) -> (i32, i32) {
    %c0_i32 = arith.constant 0 : i32
    return %arg2, %arg1 : i32, i32
  }
  func.func @transform_2(%arg0: i32, %arg1: i32, %arg2: i32) -> (i32, i32) {
    %c0_i32 = arith.constant 0 : i32
    %c0_i32_0 = arith.constant 0 : i32
    return %c0_i32, %arg1 : i32, i32
  }
  func.func @transform_3(%arg0: i32, %arg1: i32, %arg2: i32) -> (i32, i32) {
    %c0_i32 = arith.constant 0 : i32
    return %arg0, %arg1 : i32, i32
  }
  func.func @transform_4(%arg0: i32, %arg1: i32, %arg2: i32) -> (i32, i32) {
    %c0_i32 = arith.constant 0 : i32
    return %arg0, %arg1 : i32, i32
  }
}

module attributes {stable_mosaic.version = 11 : i64} {
  func.func @_ln_linear_kernel(%arg0: i32, %arg1: i32, %arg2: memref<32x32xf32, #tpu.memory_space<vmem>>, %arg3: memref<1x32xf32, #tpu.memory_space<vmem>>, %arg4: memref<1x32xf32, #tpu.memory_space<vmem>>, %arg5: memref<32x64xbf16, #tpu.memory_space<vmem>>, %arg6: memref<1x64xf32, #tpu.memory_space<vmem>>, %arg7: memref<32x64xbf16, #tpu.memory_space<vmem>>) attributes {dimension_semantics = [#tpu.dimension_semantics<parallel>, #tpu.dimension_semantics<parallel>], iteration_bounds = array<i64: 1, 1>, scalar_prefetch = 0 : i64, scratch_operands = 0 : i64, tpu.core_type = #tpu.core_type<tc>, window_params = [{transform_indices = @transform_0, window_bounds = array<i64: 32, 32>}, {pipeline_mode = #tpu.pipeline_mode<synchronous>, transform_indices = @transform_1, window_bounds = array<i64: 1, 32>}, {pipeline_mode = #tpu.pipeline_mode<synchronous>, transform_indices = @transform_2, window_bounds = array<i64: 1, 32>}, {transform_indices = @transform_3, window_bounds = array<i64: 32, 64>}, {transform_indices = @transform_4, window_bounds = array<i64: 1, 64>}, {transform_indices = @transform_5, window_bounds = array<i64: 32, 64>}]} {
    %c0 = arith.constant 0 : index
    %c0_0 = arith.constant 0 : index
    %0 = vector.load %arg2[%c0, %c0_0] : memref<32x32xf32, #tpu.memory_space<vmem>>, vector<32x32xf32>
    %cst = arith.constant dense<0.000000e+00> : vector<32xf32>
    %1 = vector.multi_reduction <add>, %0, %cst [1] : vector<32x32xf32> to vector<32xf32>
    %2 = vector.shape_cast %1 : vector<32xf32> to vector<32x1xf32>
    %cst_1 = arith.constant 3.200000e+01 : f32
    %3 = vector.broadcast %cst_1 : f32 to vector<32x1xf32>
    %4 = arith.divf %2, %3 : vector<32x1xf32>
    %5 = vector.broadcast %4 : vector<32x1xf32> to vector<32x32xf32>
    %6 = arith.subf %0, %5 : vector<32x32xf32>
    %7 = arith.mulf %6, %6 : vector<32x32xf32>
    %cst_2 = arith.constant dense<0.000000e+00> : vector<32xf32>
    %8 = vector.multi_reduction <add>, %7, %cst_2 [1] : vector<32x32xf32> to vector<32xf32>
    %9 = vector.shape_cast %8 : vector<32xf32> to vector<32x1xf32>
    %cst_3 = arith.constant 0.0322580636 : f32
    %10 = vector.broadcast %cst_3 : f32 to vector<32x1xf32>
    %11 = arith.mulf %9, %10 : vector<32x1xf32>
    %12 = math.sqrt %11 : vector<32x1xf32>
    %cst_4 = arith.constant 9.99999997E-7 : f32
    %13 = vector.broadcast %cst_4 : f32 to vector<32x1xf32>
    %14 = arith.addf %12, %13 : vector<32x1xf32>
    %15 = tpu.reciprocal %14 {approx = true} : vector<32x1xf32> -> vector<32x1xf32>
    %c0_5 = arith.constant 0 : index
    %c0_6 = arith.constant 0 : index
    %16 = vector.load %arg3[%c0_5, %c0_6] : memref<1x32xf32, #tpu.memory_space<vmem>>, vector<1x32xf32>
    %17 = vector.broadcast %4 : vector<32x1xf32> to vector<32x32xf32>
    %18 = arith.subf %0, %17 : vector<32x32xf32>
    %19 = vector.broadcast %16 : vector<1x32xf32> to vector<32x32xf32>
    %20 = arith.mulf %19, %18 : vector<32x32xf32>
    %21 = vector.broadcast %15 : vector<32x1xf32> to vector<32x32xf32>
    %22 = arith.mulf %20, %21 : vector<32x32xf32>
    %c0_7 = arith.constant 0 : index
    %c0_8 = arith.constant 0 : index
    %23 = vector.load %arg4[%c0_7, %c0_8] : memref<1x32xf32, #tpu.memory_space<vmem>>, vector<1x32xf32>
    %24 = vector.broadcast %23 : vector<1x32xf32> to vector<32x32xf32>
    %25 = arith.addf %22, %24 : vector<32x32xf32>
    %26 = arith.truncf %25 : vector<32x32xf32> to vector<32x32xbf16>
    %c0_9 = arith.constant 0 : index
    %c0_10 = arith.constant 0 : index
    %27 = vector.load %arg5[%c0_9, %c0_10] : memref<32x64xbf16, #tpu.memory_space<vmem>>, vector<32x64xbf16>
    %cst_11 = arith.constant dense<0.000000e+00> : vector<32x64xf32>
    %28 = tpu.matmul %26, %27, %cst_11 {dimension_numbers = #tpu.dot_dimension_numbers<[1], [0], [0], [1], [0, 0, 1, 1], [], []>} : vector<32x32xbf16>, vector<32x64xbf16>, vector<32x64xf32> -> vector<32x64xf32>
    %c0_12 = arith.constant 0 : index
    %c0_13 = arith.constant 0 : index
    %29 = vector.load %arg6[%c0_12, %c0_13] : memref<1x64xf32, #tpu.memory_space<vmem>>, vector<1x64xf32>
    %30 = vector.broadcast %29 : vector<1x64xf32> to vector<32x64xf32>
    %31 = arith.addf %28, %30 : vector<32x64xf32>
    %cst_14 = arith.constant 0.000000e+00 : f32
    %32 = vector.broadcast %cst_14 : f32 to vector<32x64xf32>
    %33 = arith.maximumf %31, %32 : vector<32x64xf32>
    %34 = arith.truncf %33 : vector<32x64xf32> to vector<32x64xbf16>
    %c0_15 = arith.constant 0 : index
    %c0_16 = arith.constant 0 : index
    %35 = vector.load %arg7[%c0_15, %c0_16] : memref<32x64xbf16, #tpu.memory_space<vmem>>, vector<32x64xbf16>
    tpu.vector_store %arg7[%c0_15, %c0_16], %34 {strides = array<i32>} : memref<32x64xbf16, #tpu.memory_space<vmem>>, vector<32x64xbf16>,
    return
  }
  func.func @transform_0(%arg0: i32, %arg1: i32) -> (i32, i32) {
    %c0_i32 = arith.constant 0 : i32
    %c0_i32_0 = arith.constant 0 : i32
    return %arg0, %c0_i32 : i32, i32
  }
  func.func @transform_1(%arg0: i32, %arg1: i32) -> (i32, i32) {
    %c0_i32 = arith.constant 0 : i32
    %c0_i32_0 = arith.constant 0 : i32
    %c0_i32_1 = arith.constant 0 : i32
    return %c0_i32, %c0_i32_0 : i32, i32
  }
  func.func @transform_2(%arg0: i32, %arg1: i32) -> (i32, i32) {
    %c0_i32 = arith.constant 0 : i32
    %c0_i32_0 = arith.constant 0 : i32
    %c0_i32_1 = arith.constant 0 : i32
    return %c0_i32, %c0_i32_0 : i32, i32
  }
  func.func @transform_3(%arg0: i32, %arg1: i32) -> (i32, i32) {
    %c0_i32 = arith.constant 0 : i32
    %c0_i32_0 = arith.constant 0 : i32
    return %c0_i32, %arg1 : i32, i32
  }
  func.func @transform_4(%arg0: i32, %arg1: i32) -> (i32, i32) {
    %c0_i32 = arith.constant 0 : i32
    %c0_i32_0 = arith.constant 0 : i32
    return %c0_i32, %arg1 : i32, i32
  }
  func.func @transform_5(%arg0: i32, %arg1: i32) -> (i32, i32) {
    %c0_i32 = arith.constant 0 : i32
    return %arg0, %arg1 : i32, i32
  }
}

module attributes {stable_mosaic.version = 11 : i64} {
  func.func @_layernorm_kernel(%arg0: i32, %arg1: memref<32x32xf32, #tpu.memory_space<vmem>>, %arg2: memref<1x32xf32, #tpu.memory_space<vmem>>, %arg3: memref<1x32xf32, #tpu.memory_space<vmem>>, %arg4: memref<32x32xf32, #tpu.memory_space<vmem>>) attributes {dimension_semantics = [#tpu.dimension_semantics<parallel>], iteration_bounds = array<i64: 1>, scalar_prefetch = 0 : i64, scratch_operands = 0 : i64, tpu.core_type = #tpu.core_type<tc>, window_params = [{transform_indices = @transform_0, window_bounds = array<i64: 32, 32>}, {pipeline_mode = #tpu.pipeline_mode<synchronous>, transform_indices = @transform_1, window_bounds = array<i64: 1, 32>}, {pipeline_mode = #tpu.pipeline_mode<synchronous>, transform_indices = @transform_2, window_bounds = array<i64: 1, 32>}, {transform_indices = @transform_3, window_bounds = array<i64: 32, 32>}]} {
    %c0 = arith.constant 0 : index
    %c0_0 = arith.constant 0 : index
    %0 = vector.load %arg1[%c0, %c0_0] : memref<32x32xf32, #tpu.memory_space<vmem>>, vector<32x32xf32>
    %cst = arith.constant dense<0.000000e+00> : vector<32xf32>
    %1 = vector.multi_reduction <add>, %0, %cst [1] : vector<32x32xf32> to vector<32xf32>
    %2 = vector.shape_cast %1 : vector<32xf32> to vector<32x1xf32>
    %cst_1 = arith.constant 3.200000e+01 : f32
    %3 = vector.broadcast %cst_1 : f32 to vector<32x1xf32>
    %4 = arith.divf %2, %3 : vector<32x1xf32>
    %5 = vector.broadcast %4 : vector<32x1xf32> to vector<32x32xf32>
    %6 = arith.subf %0, %5 : vector<32x32xf32>
    %7 = arith.mulf %6, %6 : vector<32x32xf32>
    %cst_2 = arith.constant dense<0.000000e+00> : vector<32xf32>
    %8 = vector.multi_reduction <add>, %7, %cst_2 [1] : vector<32x32xf32> to vector<32xf32>
    %9 = vector.shape_cast %8 : vector<32xf32> to vector<32x1xf32>
    %cst_3 = arith.constant 0.0322580636 : f32
    %10 = vector.broadcast %cst_3 : f32 to vector<32x1xf32>
    %11 = arith.mulf %9, %10 : vector<32x1xf32>
    %12 = math.sqrt %11 : vector<32x1xf32>
    %cst_4 = arith.constant 9.99999997E-7 : f32
    %13 = vector.broadcast %cst_4 : f32 to vector<32x1xf32>
    %14 = arith.addf %12, %13 : vector<32x1xf32>
    %15 = tpu.reciprocal %14 {approx = true} : vector<32x1xf32> -> vector<32x1xf32>
    %c0_5 = arith.constant 0 : index
    %c0_6 = arith.constant 0 : index
    %16 = vector.load %arg2[%c0_5, %c0_6] : memref<1x32xf32, #tpu.memory_space<vmem>>, vector<1x32xf32>
    %17 = vector.broadcast %4 : vector<32x1xf32> to vector<32x32xf32>
    %18 = arith.subf %0, %17 : vector<32x32xf32>
    %19 = vector.broadcast %16 : vector<1x32xf32> to vector<32x32xf32>
    %20 = arith.mulf %19, %18 : vector<32x32xf32>
    %21 = vector.broadcast %15 : vector<32x1xf32> to vector<32x32xf32>
    %22 = arith.mulf %20, %21 : vector<32x32xf32>
    %c0_7 = arith.constant 0 : index
    %c0_8 = arith.constant 0 : index
    %23 = vector.load %arg3[%c0_7, %c0_8] : memref<1x32xf32, #tpu.memory_space<vmem>>, vector<1x32xf32>
    %24 = vector.broadcast %23 : vector<1x32xf32> to vector<32x32xf32>
    %25 = arith.addf %22, %24 : vector<32x32xf32>
    %c0_9 = arith.constant 0 : index
    %c0_10 = arith.constant 0 : index
    %26 = vector.load %arg4[%c0_9, %c0_10] : memref<32x32xf32, #tpu.memory_space<vmem>>, vector<32x32xf32>
    tpu.vector_store %arg4[%c0_9, %c0_10], %25 {strides = array<i32>} : memref<32x32xf32, #tpu.memory_space<vmem>>, vector<32x32xf32>,
    return
  }
  func.func @transform_0(%arg0: i32) -> (i32, i32) {
    %c0_i32 = arith.constant 0 : i32
    %c0_i32_0 = arith.constant 0 : i32
    return %arg0, %c0_i32 : i32, i32
  }
  func.func @transform_1(%arg0: i32) -> (i32, i32) {
    %c0_i32 = arith.constant 0 : i32
    %c0_i32_0 = arith.constant 0 : i32
    %c0_i32_1 = arith.constant 0 : i32
    return %c0_i32, %c0_i32_0 : i32, i32
  }
  func.func @transform_2(%arg0: i32) -> (i32, i32) {
    %c0_i32 = arith.constant 0 : i32
    %c0_i32_0 = arith.constant 0 : i32
    %c0_i32_1 = arith.constant 0 : i32
    return %c0_i32, %c0_i32_0 : i32, i32
  }
  func.func @transform_3(%arg0: i32) -> (i32, i32) {
    %c0_i32 = arith.constant 0 : i32
    %c0_i32_0 = arith.constant 0 : i32
    return %arg0, %c0_i32 : i32, i32
  }
}

</mosaic_0001>

<llo_original>
// kernel: encoder_bottom_up_forward.13
$region0: #{encoder_bottom_up_forward.13}
  #allocation0 [shape = 'u32[]', space=smem, size = 0x4, offset = 0x4, fixed_abs, tag = 'smem constant byte address 0x4 - core index']
  #allocation1 [shape = 'u32[144,128]{1,0:T(1,128)}', space=vmem, size = 0x12000, scoped, tag = 'internal scratch']
  #allocation2 [shape = 'f32[32,32]{1,0:T(8,128)}', space=vmem, size = 0x4000, scoped, tag = 'scratch operand']
  %s0 = inlined_call_operand.vmem [shape: bf16[32,5], index: 0, kind: input, shape index: {}]
  %s1 = inlined_call_operand.vmem [shape: bf16[5,32], index: 1, kind: input, shape index: {}]
  %s2 = inlined_call_operand.vmem [shape: f32[1,32], index: 2, kind: input, shape index: {}]
  %s3 = inlined_call_operand.vmem [shape: f32[32,32], index: 3, kind: output, shape index: {}]
  %s4 = sld [smem:[#allocation0]]
  $region30: #{encoder_bottom_up_forward.13} parent=0
    _
  %s6 = ssub.s32 1, %s4
  %s7 = scalar_select 0, %s6, %s4
  // Predicated region
  $region2: #{encoder_bottom_up_forward.13} parent=0 // pred_check
    _
  $region3: #{encoder_bottom_up_forward.13} parent=0 // pred_check_branch
    %9 = sbr.rel (0) target = $region5
  $region4: #{encoder_bottom_up_forward.13} parent=0 // pred_region
    _
  $region5: #{encoder_bottom_up_forward.13} parent=0 // pred_fallthru
    _
  // Predicated region
  $region6: #{encoder_bottom_up_forward.13} parent=0 // pred_check
    _
  $region7: #{encoder_bottom_up_forward.13} parent=0 // pred_check_branch
    %11 = sbr.rel (0) target = $region9
  $region8: #{encoder_bottom_up_forward.13} parent=0 // pred_region
    _
  $region9: #{encoder_bottom_up_forward.13} parent=0 // pred_fallthru
    _
  // Predicated region
  $region10: #{encoder_bottom_up_forward.13} parent=0 // pred_check
    _
  $region11: #{encoder_bottom_up_forward.13} parent=0 // pred_check_branch
    %13 = sbr.rel (0) target = $region13
  $region12: #{encoder_bottom_up_forward.13} parent=0 // pred_region
    _
  $region13: #{encoder_bottom_up_forward.13} parent=0 // pred_fallthru
    _
  %p15 = scmp.eq.s32.totalorder 0, 0
  // Predicated region
  $region14: #{encoder_bottom_up_forward.13} parent=0 // pred_check
    %p16 = pneg %p15
  $region15: #{encoder_bottom_up_forward.13} parent=0 // pred_check_branch
    %18 = sbr.rel (%p16) target = $region17
  $region16: #{encoder_bottom_up_forward.13} parent=0 // pred_region
    %vm19 = vcmask 261120
    %20 = vst.msk [vmem:[#allocation2] sm:$0xff] %vm19, 0.0
    %21 = vst.msk [vmem:[#allocation2 + $0x8] sm:$0xff] %vm19, 0.0
    %22 = vst.msk [vmem:[#allocation2 + $0x10] sm:$0xff] %vm19, 0.0
    %23 = vst.msk [vmem:[#allocation2 + $0x18] sm:$0xff] %vm19, 0.0
  $region17: #{encoder_bottom_up_forward.13} parent=0 // pred_fallthru
    _
  %v24 = vld [vmem:[#allocation2] sm:$0xff]
  %v25 = vld [vmem:[#allocation2 + $0x8] sm:$0xff]
  %v26 = vld [vmem:[#allocation2 + $0x10] sm:$0xff]
  %v27 = vld [vmem:[#allocation2 + $0x18] sm:$0xff]
  %v28 = vld [vmem:[%s0] sm:$0xf]
  %v29 = vld [vmem:[%s0 + $0x4] sm:$0xf]
  %v30 = vld [vmem:[%s0 + $0x8] sm:$0xf]
  %v31 = vld [vmem:[%s0 + $0xc] sm:$0xf]
  %v32 = vld [vmem:[%s1] sm:$0x7]
  %v37 = vunpack.c.l.b16 %v28
  %v38 = vunpack.c.l.b16 %v29
  %v39 = vunpack.c.l.b16 %v30
  %v40 = vunpack.c.l.b16 %v31
  %v41 = vpack.c.b16 %v38, %v37
  %v42 = vpack.c.b16 %v40, %v39
  %vm43 = vcmask 39936
  %v45 = vsel %vm43, %v41, 0
  %v48 = vsel %vm43, %v42, 0
  %vm50 = vcmask 1041408
  %vm51 = vcmask 1042432
  %v52 = vsel %vm50, 4294967295, 65535
  %v53 = vsel %vm51, %v52, 0
  %v55 = vand.u32 %v32, %v53
  %57 = vmatprep.subr.bf16.mxu0 0
  %58 = vmatpush1.bf16.msra.mxu0 %v55
  %59 = vmatprep.subr.bf16.mxu0 0
  %60 = vmatpush1.bf16.msra.mxu0 0
  %61 = vmatprep.subr.bf16.mxu0 0
  %62 = vmatpush1.bf16.msra.mxu0 0
  %63 = vmatprep.subr.bf16.mxu0 0
  %64 = vmatpush1.bf16.msra.mxu0 0
  %65 = vmatprep.subr.bf16.mxu0 0
  %66 = vmatpush1.bf16.msra.mxu0 0
  %67 = vmatprep.subr.bf16.mxu0 0
  %68 = vmatpush1.bf16.msra.mxu0 0
  %69 = vmatprep.subr.bf16.mxu0 0
  %70 = vmatpush1.bf16.msra.mxu0 0
  %71 = vmatprep.subr.bf16.mxu0 0
  %72 = vmatpush1.bf16.msra.mxu0 0
  %73 = vmatprep.subr.bf16.mxu0 0
  %74 = vmatpush1.bf16.msra.mxu0 0
  %75 = vmatprep.subr.bf16.mxu0 0
  %76 = vmatpush1.bf16.msra.mxu0 0
  %77 = vmatprep.subr.bf16.mxu0 0
  %78 = vmatpush1.bf16.msra.mxu0 0
  %79 = vmatprep.subr.bf16.mxu0 0
  %80 = vmatpush1.bf16.msra.mxu0 0
  %81 = vmatprep.subr.bf16.mxu0 0
  %82 = vmatpush1.bf16.msra.mxu0 0
  %83 = vmatprep.subr.bf16.mxu0 0
  %84 = vmatpush1.bf16.msra.mxu0 0
  %85 = vmatprep.subr.bf16.mxu0 0
  %86 = vmatpush1.bf16.msra.mxu0 0
  %87 = vmatprep.subr.bf16.mxu0 0
  %88 = vmatpush1.bf16.msra.mxu0 0
  %89 = vmatprep.mubr.bf16.mxu0 0
  %90 = vmatmul.mubr.bf16.gmra.mrb[0].mxu0 %v45
  %v91 = vpop.f32.mrb[0].mxu0
  %v92 = vadd.f32 0.0, %v91
  %v93 = vpop.f32.mrb[0].mxu0
  %v94 = vpop.f32.mrb[0].mxu0
  %v95 = vadd.f32 0.0, %v94
  %v96 = vpop.f32.mrb[0].mxu0
  %97 = vmatprep.mubr.bf16.mxu0 0
  %98 = vmatmul.mubr.bf16.gmra.mrb[0].mxu0 %v48
  %v99 = vpop.f32.mrb[0].mxu0
  %v100 = vadd.f32 0.0, %v99
  %v101 = vpop.f32.mrb[0].mxu0
  %v102 = vpop.f32.mrb[0].mxu0
  %v103 = vadd.f32 0.0, %v102
  %v104 = vpop.f32.mrb[0].mxu0
  %105 = vdwg.mxu0
  %v106 = vadd.f32 %v24, %v92
  %v107 = vadd.f32 %v25, %v95
  %v108 = vadd.f32 %v26, %v100
  %v109 = vadd.f32 %v27, %v103
  %vm110 = vcmask 261120
  %111 = vst.msk [vmem:[#allocation2] sm:$0xff] %vm110, %v106
  %112 = vst.msk [vmem:[#allocation2 + $0x8] sm:$0xff] %vm110, %v107
  %113 = vst.msk [vmem:[#allocation2 + $0x10] sm:$0xff] %vm110, %v108
  %114 = vst.msk [vmem:[#allocation2 + $0x18] sm:$0xff] %vm110, %v109
  // Predicated region
  $region18: #{encoder_bottom_up_forward.13} parent=0 // pred_check
    %p115 = pneg %p15
  $region19: #{encoder_bottom_up_forward.13} parent=0 // pred_check_branch
    %117 = sbr.rel (%p115) target = $region21
  $region20: #{encoder_bottom_up_forward.13} parent=0 // pred_region
    %v118 = vld [vmem:[#allocation2] sm:$0xff]
    %v119 = vld [vmem:[#allocation2 + $0x8] sm:$0xff]
    %v120 = vld [vmem:[#allocation2 + $0x10] sm:$0xff]
    %v121 = vld [vmem:[#allocation2 + $0x18] sm:$0xff]
    %v122 = vld [vmem:[%s2] sm:$0x1]
    %v124 = vlaneseq
    %v125 = vshrl.u32 %v124, 7
    %v126 = vsub.s32 0, %v125
    %v127 = vrot.slane %v122, %v126
    %v129 = vadd.f32 %v118, %v127
    %v130 = vadd.f32 %v119, %v127
    %v131 = vadd.f32 %v120, %v127
    %v132 = vadd.f32 %v121, %v127
    %133 = vst.msk [vmem:[%s3] sm:$0xff] %vm110, %v129
    %134 = vst.msk [vmem:[%s3 + $0x8] sm:$0xff] %vm110, %v130
    %135 = vst.msk [vmem:[%s3 + $0x10] sm:$0xff] %vm110, %v131
    %136 = vst.msk [vmem:[%s3 + $0x18] sm:$0xff] %vm110, %v132
  $region21: #{encoder_bottom_up_forward.13} parent=0 // pred_fallthru
    _
  // Predicated region
  $region22: #{encoder_bottom_up_forward.13} parent=0 // pred_check
    _
  $region23: #{encoder_bottom_up_forward.13} parent=0 // pred_check_branch
    %138 = sbr.rel (0) target = $region25
  $region24: #{encoder_bottom_up_forward.13} parent=0 // pred_region
    _
  $region25: #{encoder_bottom_up_forward.13} parent=0 // pred_fallthru
    _
  // Predicated region
  $region26: #{encoder_bottom_up_forward.13} parent=0 // pred_check
    _
  $region27: #{encoder_bottom_up_forward.13} parent=0 // pred_check_branch
    %140 = sbr.rel (0) target = $region29
  $region28: #{encoder_bottom_up_forward.13} parent=0 // pred_region
    _
  $region29: #{encoder_bottom_up_forward.13} parent=0 // pred_fallthru
    _

// kernel: encoder_bottom_up_forward.14
$region0: #{encoder_bottom_up_forward.14}
  #allocation0 [shape = 'u32[]', space=smem, size = 0x4, offset = 0x4, fixed_abs, tag = 'smem constant byte address 0x4 - core index']
  #allocation1 [shape = 'u32[144,128]{1,0:T(1,128)}', space=vmem, size = 0x12000, scoped, tag = 'internal scratch']
  #allocation2 [shape = 'f32[32,32]{1,0:T(8,128)}', space=vmem, size = 0x4000, scoped, tag = 'scratch operand']
  %s0 = inlined_call_operand.vmem [shape: bf16[32,64], index: 0, kind: input, shape index: {}]
  %s1 = inlined_call_operand.vmem [shape: bf16[64,32], index: 1, kind: input, shape index: {}]
  %s2 = inlined_call_operand.vmem [shape: f32[1,32], index: 2, kind: input, shape index: {}]
  %s3 = inlined_call_operand.vmem [shape: f32[32,32], index: 3, kind: input, shape index: {}]
  %s4 = inlined_call_operand.vmem [shape: f32[32,32], index: 4, kind: output, shape index: {}]
  %s5 = sld [smem:[#allocation0]]
  $region34: #{encoder_bottom_up_forward.14} parent=0
    _
  %s7 = ssub.s32 1, %s5
  %s8 = scalar_select 0, %s7, %s5
  // Predicated region
  $region2: #{encoder_bottom_up_forward.14} parent=0 // pred_check
    _
  $region3: #{encoder_bottom_up_forward.14} parent=0 // pred_check_branch
    %10 = sbr.rel (0) target = $region5
  $region4: #{encoder_bottom_up_forward.14} parent=0 // pred_region
    _
  $region5: #{encoder_bottom_up_forward.14} parent=0 // pred_fallthru
    _
  // Predicated region
  $region6: #{encoder_bottom_up_forward.14} parent=0 // pred_check
    _
  $region7: #{encoder_bottom_up_forward.14} parent=0 // pred_check_branch
    %12 = sbr.rel (0) target = $region9
  $region8: #{encoder_bottom_up_forward.14} parent=0 // pred_region
    _
  $region9: #{encoder_bottom_up_forward.14} parent=0 // pred_fallthru
    _
  // Predicated region
  $region10: #{encoder_bottom_up_forward.14} parent=0 // pred_check
    _
  $region11: #{encoder_bottom_up_forward.14} parent=0 // pred_check_branch
    %14 = sbr.rel (0) target = $region13
  $region12: #{encoder_bottom_up_forward.14} parent=0 // pred_region
    _
  $region13: #{encoder_bottom_up_forward.14} parent=0 // pred_fallthru
    _
  // Predicated region
  $region14: #{encoder_bottom_up_forward.14} parent=0 // pred_check
    _
  $region15: #{encoder_bottom_up_forward.14} parent=0 // pred_check_branch
    %16 = sbr.rel (0) target = $region17
  $region16: #{encoder_bottom_up_forward.14} parent=0 // pred_region
    _
  $region17: #{encoder_bottom_up_forward.14} parent=0 // pred_fallthru
    _
  %p18 = scmp.eq.s32.totalorder 0, 0
  // Predicated region
  $region18: #{encoder_bottom_up_forward.14} parent=0 // pred_check
    %p19 = pneg %p18
  $region19: #{encoder_bottom_up_forward.14} parent=0 // pred_check_branch
    %21 = sbr.rel (%p19) target = $region21
  $region20: #{encoder_bottom_up_forward.14} parent=0 // pred_region
    %vm22 = vcmask 261120
    %23 = vst.msk [vmem:[#allocation2] sm:$0xff] %vm22, 0.0
    %24 = vst.msk [vmem:[#allocation2 + $0x8] sm:$0xff] %vm22, 0.0
    %25 = vst.msk [vmem:[#allocation2 + $0x10] sm:$0xff] %vm22, 0.0
    %26 = vst.msk [vmem:[#allocation2 + $0x18] sm:$0xff] %vm22, 0.0
  $region21: #{encoder_bottom_up_forward.14} parent=0 // pred_fallthru
    _
  %v27 = vld [vmem:[#allocation2] sm:$0xff]
  %v28 = vld [vmem:[#allocation2 + $0x8] sm:$0xff]
  %v29 = vld [vmem:[#allocation2 + $0x10] sm:$0xff]
  %v30 = vld [vmem:[#allocation2 + $0x18] sm:$0xff]
  %v31 = vld [vmem:[%s0] sm:$0xf]
  %v32 = vld [vmem:[%s0 + $0x4] sm:$0xf]
  %v33 = vld [vmem:[%s0 + $0x8] sm:$0xf]
  %v34 = vld [vmem:[%s0 + $0xc] sm:$0xf]
  %v35 = vld [vmem:[%s1] sm:$0xf]
  %v36 = vld [vmem:[%s1 + $0x4] sm:$0xf]
  %v37 = vld [vmem:[%s1 + $0x8] sm:$0xf]
  %v38 = vld [vmem:[%s1 + $0xc] sm:$0xf]
  %v39 = vld [vmem:[%s1 + $0x10] sm:$0xf]
  %v40 = vld [vmem:[%s1 + $0x14] sm:$0xf]
  %v41 = vld [vmem:[%s1 + $0x18] sm:$0xf]
  %v42 = vld [vmem:[%s1 + $0x1c] sm:$0xf]
  %v47 = vunpack.c.l.b16 %v31
  %v48 = vunpack.c.l.b16 %v32
  %v49 = vunpack.c.l.b16 %v33
  %v50 = vunpack.c.l.b16 %v34
  %v51 = vpack.c.b16 %v48, %v47
  %v52 = vpack.c.b16 %v50, %v49
  %v61 = vunpack.c.l.b16 %v35
  %v62 = vunpack.c.l.b16 %v36
  %v63 = vunpack.c.l.b16 %v37
  %v64 = vunpack.c.l.b16 %v38
  %v65 = vunpack.c.l.b16 %v39
  %v66 = vunpack.c.l.b16 %v40
  %v67 = vunpack.c.l.b16 %v41
  %v68 = vunpack.c.l.b16 %v42
  %v69 = vpack.c.b16 %v62, %v61
  %v70 = vpack.c.b16 %v64, %v63
  %v71 = vpack.c.b16 %v66, %v65
  %v72 = vpack.c.b16 %v68, %v67
  %vm77 = vcmask 523264
  %v79 = vsel %vm77, %v51, 0
  %v82 = vsel %vm77, %v52, 0
  %84 = vmatprep.subr.bf16.mxu0 0
  %85 = vmatpush1.bf16.msra.mxu0 %v69
  %86 = vmatprep.subr.bf16.mxu0 0
  %87 = vmatpush1.bf16.msra.mxu0 %v70
  %88 = vmatprep.subr.bf16.mxu0 0
  %89 = vmatpush1.bf16.msra.mxu0 %v71
  %90 = vmatprep.subr.bf16.mxu0 0
  %91 = vmatpush1.bf16.msra.mxu0 %v72
  %92 = vmatprep.subr.bf16.mxu0 0
  %93 = vmatpush1.bf16.msra.mxu0 0
  %94 = vmatprep.subr.bf16.mxu0 0
  %95 = vmatpush1.bf16.msra.mxu0 0
  %96 = vmatprep.subr.bf16.mxu0 0
  %97 = vmatpush1.bf16.msra.mxu0 0
  %98 = vmatprep.subr.bf16.mxu0 0
  %99 = vmatpush1.bf16.msra.mxu0 0
  %100 = vmatprep.subr.bf16.mxu0 0
  %101 = vmatpush1.bf16.msra.mxu0 0
  %102 = vmatprep.subr.bf16.mxu0 0
  %103 = vmatpush1.bf16.msra.mxu0 0
  %104 = vmatprep.subr.bf16.mxu0 0
  %105 = vmatpush1.bf16.msra.mxu0 0
  %106 = vmatprep.subr.bf16.mxu0 0
  %107 = vmatpush1.bf16.msra.mxu0 0
  %108 = vmatprep.subr.bf16.mxu0 0
  %109 = vmatpush1.bf16.msra.mxu0 0
  %110 = vmatprep.subr.bf16.mxu0 0
  %111 = vmatpush1.bf16.msra.mxu0 0
  %112 = vmatprep.subr.bf16.mxu0 0
  %113 = vmatpush1.bf16.msra.mxu0 0
  %114 = vmatprep.subr.bf16.mxu0 0
  %115 = vmatpush1.bf16.msra.mxu0 0
  %116 = vmatprep.mubr.bf16.mxu0 0
  %117 = vmatmul.mubr.bf16.gmra.mrb[0].mxu0 %v79
  %v118 = vpop.f32.mrb[0].mxu0
  %v119 = vadd.f32 0.0, %v118
  %v120 = vpop.f32.mrb[0].mxu0
  %v121 = vpop.f32.mrb[0].mxu0
  %v122 = vadd.f32 0.0, %v121
  %v123 = vpop.f32.mrb[0].mxu0
  %124 = vmatprep.mubr.bf16.mxu0 0
  %125 = vmatmul.mubr.bf16.gmra.mrb[0].mxu0 %v82
  %v126 = vpop.f32.mrb[0].mxu0
  %v127 = vadd.f32 0.0, %v126
  %v128 = vpop.f32.mrb[0].mxu0
  %v129 = vpop.f32.mrb[0].mxu0
  %v130 = vadd.f32 0.0, %v129
  %v131 = vpop.f32.mrb[0].mxu0
  %132 = vdwg.mxu0
  %v133 = vadd.f32 %v27, %v119
  %v134 = vadd.f32 %v28, %v122
  %v135 = vadd.f32 %v29, %v127
  %v136 = vadd.f32 %v30, %v130
  %vm137 = vcmask 261120
  %138 = vst.msk [vmem:[#allocation2] sm:$0xff] %vm137, %v133
  %139 = vst.msk [vmem:[#allocation2 + $0x8] sm:$0xff] %vm137, %v134
  %140 = vst.msk [vmem:[#allocation2 + $0x10] sm:$0xff] %vm137, %v135
  %141 = vst.msk [vmem:[#allocation2 + $0x18] sm:$0xff] %vm137, %v136
  // Predicated region
  $region22: #{encoder_bottom_up_forward.14} parent=0 // pred_check
    %p142 = pneg %p18
  $region23: #{encoder_bottom_up_forward.14} parent=0 // pred_check_branch
    %144 = sbr.rel (%p142) target = $region25
  $region24: #{encoder_bottom_up_forward.14} parent=0 // pred_region
    %v145 = vld [vmem:[#allocation2] sm:$0xff]
    %v146 = vld [vmem:[#allocation2 + $0x8] sm:$0xff]
    %v147 = vld [vmem:[#allocation2 + $0x10] sm:$0xff]
    %v148 = vld [vmem:[#allocation2 + $0x18] sm:$0xff]
    %v149 = vld [vmem:[%s2] sm:$0x1]
    %v151 = vlaneseq
    %v152 = vshrl.u32 %v151, 7
    %v153 = vsub.s32 0, %v152
    %v154 = vrot.slane %v149, %v153
    %v156 = vadd.f32 %v145, %v154
    %v157 = vadd.f32 %v146, %v154
    %v158 = vadd.f32 %v147, %v154
    %v159 = vadd.f32 %v148, %v154
    %v160 = vld [vmem:[%s3] sm:$0xff]
    %v161 = vld [vmem:[%s3 + $0x8] sm:$0xff]
    %v162 = vld [vmem:[%s3 + $0x10] sm:$0xff]
    %v163 = vld [vmem:[%s3 + $0x18] sm:$0xff]
    %v164 = vadd.f32 %v156, %v160
    %v165 = vadd.f32 %v157, %v161
    %v166 = vadd.f32 %v158, %v162
    %v167 = vadd.f32 %v159, %v163
    %168 = vst.msk [vmem:[%s4] sm:$0xff] %vm137, %v164
    %169 = vst.msk [vmem:[%s4 + $0x8] sm:$0xff] %vm137, %v165
    %170 = vst.msk [vmem:[%s4 + $0x10] sm:$0xff] %vm137, %v166
    %171 = vst.msk [vmem:[%s4 + $0x18] sm:$0xff] %vm137, %v167
  $region25: #{encoder_bottom_up_forward.14} parent=0 // pred_fallthru
    _
  // Predicated region
  $region26: #{encoder_bottom_up_forward.14} parent=0 // pred_check
    _
  $region27: #{encoder_bottom_up_forward.14} parent=0 // pred_check_branch
    %173 = sbr.rel (0) target = $region29
  $region28: #{encoder_bottom_up_forward.14} parent=0 // pred_region
    _
  $region29: #{encoder_bottom_up_forward.14} parent=0 // pred_fallthru
    _
  // Predicated region
  $region30: #{encoder_bottom_up_forward.14} parent=0 // pred_check
    _
  $region31: #{encoder_bottom_up_forward.14} parent=0 // pred_check_branch
    %175 = sbr.rel (0) target = $region33
  $region32: #{encoder_bottom_up_forward.14} parent=0 // pred_region
    _
  $region33: #{encoder_bottom_up_forward.14} parent=0 // pred_fallthru
    _

// kernel: encoder_bottom_up_forward.15
$region0: #{encoder_bottom_up_forward.15}
  #allocation0 [shape = 'u32[]', space=smem, size = 0x4, offset = 0x4, fixed_abs, tag = 'smem constant byte address 0x4 - core index']
  #allocation1 [shape = 'u32[144,128]{1,0:T(1,128)}', space=vmem, size = 0x12000, scoped, tag = 'internal scratch']
  %s0 = inlined_call_operand.vmem [shape: f32[32,32], index: 0, kind: input, shape index: {}]
  %s1 = inlined_call_operand.vmem [shape: f32[1,32], index: 1, kind: input, shape index: {}]
  %s2 = inlined_call_operand.vmem [shape: f32[1,32], index: 2, kind: input, shape index: {}]
  %s3 = inlined_call_operand.vmem [shape: bf16[32,96], index: 3, kind: input, shape index: {}]
  %s4 = inlined_call_operand.vmem [shape: f32[1,96], index: 4, kind: input, shape index: {}]
  %s5 = inlined_call_operand.vmem [shape: bf16[32,96], index: 5, kind: output, shape index: {}]
  %s6 = sld [smem:[#allocation0]]
  $region30: #{encoder_bottom_up_forward.15} parent=0
    _
  %s8 = ssub.s32 1, %s6
  %s9 = scalar_select 0, %s8, %s6
  // Predicated region
  $region2: #{encoder_bottom_up_forward.15} parent=0 // pred_check
    _
  $region3: #{encoder_bottom_up_forward.15} parent=0 // pred_check_branch
    %11 = sbr.rel (0) target = $region5
  $region4: #{encoder_bottom_up_forward.15} parent=0 // pred_region
    _
  $region5: #{encoder_bottom_up_forward.15} parent=0 // pred_fallthru
    _
  // Predicated region
  $region6: #{encoder_bottom_up_forward.15} parent=0 // pred_check
    _
  $region7: #{encoder_bottom_up_forward.15} parent=0 // pred_check_branch
    %13 = sbr.rel (0) target = $region9
  $region8: #{encoder_bottom_up_forward.15} parent=0 // pred_region
    _
  $region9: #{encoder_bottom_up_forward.15} parent=0 // pred_fallthru
    _
  // Predicated region
  $region10: #{encoder_bottom_up_forward.15} parent=0 // pred_check
    _
  $region11: #{encoder_bottom_up_forward.15} parent=0 // pred_check_branch
    %15 = sbr.rel (0) target = $region13
  $region12: #{encoder_bottom_up_forward.15} parent=0 // pred_region
    _
  $region13: #{encoder_bottom_up_forward.15} parent=0 // pred_fallthru
    _
  // Predicated region
  $region14: #{encoder_bottom_up_forward.15} parent=0 // pred_check
    _
  $region15: #{encoder_bottom_up_forward.15} parent=0 // pred_check_branch
    %17 = sbr.rel (0) target = $region17
  $region16: #{encoder_bottom_up_forward.15} parent=0 // pred_region
    _
  $region17: #{encoder_bottom_up_forward.15} parent=0 // pred_fallthru
    _
  // Predicated region
  $region18: #{encoder_bottom_up_forward.15} parent=0 // pred_check
    _
  $region19: #{encoder_bottom_up_forward.15} parent=0 // pred_check_branch
    %19 = sbr.rel (0) target = $region21
  $region20: #{encoder_bottom_up_forward.15} parent=0 // pred_region
    _
  $region21: #{encoder_bottom_up_forward.15} parent=0 // pred_fallthru
    _
  %v21 = vld [vmem:[%s0] sm:$0xff]
  %v22 = vld [vmem:[%s0 + $0x8] sm:$0xff]
  %v23 = vld [vmem:[%s0 + $0x10] sm:$0xff]
  %v24 = vld [vmem:[%s0 + $0x18] sm:$0xff]
  %vm25 = vcmask 261120
  %v26 = vsel %vm25, %v21, 0.0
  %27 = vadd.xlane.f32.xlu0 %v26
  %v28 = vpop.xlane.xlu0 %27
  %v29 = vsel %vm25, %v22, 0.0
  %30 = vadd.xlane.f32.xlu0 %v29
  %v31 = vpop.xlane.xlu0 %30
  %v32 = vsel %vm25, %v23, 0.0
  %33 = vadd.xlane.f32.xlu0 %v32
  %v34 = vpop.xlane.xlu0 %33
  %v35 = vsel %vm25, %v24, 0.0
  %36 = vadd.xlane.f32.xlu0 %v35
  %v37 = vpop.xlane.xlu0 %36
  %v38 = vrcp.pop 32.0
  %v39 = vmul.f32 %v28, %v38
  %v40 = vmul.f32 %v31, %v38
  %v41 = vmul.f32 %v34, %v38
  %v42 = vmul.f32 %v37, %v38
  %v43 = vsub.f32 %v21, %v39
  %v44 = vsub.f32 %v22, %v40
  %v45 = vsub.f32 %v23, %v41
  %v46 = vsub.f32 %v24, %v42
  %v47 = vmul.f32 %v43, %v43
  %v48 = vmul.f32 %v44, %v44
  %v49 = vmul.f32 %v45, %v45
  %v50 = vmul.f32 %v46, %v46
  %v51 = vsel %vm25, %v47, 0.0
  %52 = vadd.xlane.f32.xlu0 %v51
  %v53 = vpop.xlane.xlu0 %52
  %v54 = vsel %vm25, %v48, 0.0
  %55 = vadd.xlane.f32.xlu0 %v54
  %v56 = vpop.xlane.xlu0 %55
  %v57 = vsel %vm25, %v49, 0.0
  %58 = vadd.xlane.f32.xlu0 %v57
  %v59 = vpop.xlane.xlu0 %58
  %v60 = vsel %vm25, %v50, 0.0
  %61 = vadd.xlane.f32.xlu0 %v60
  %v62 = vpop.xlane.xlu0 %61
  %v63 = vmul.f32 %v53, 0.032258064
  %v64 = vmul.f32 %v56, 0.032258064
  %v65 = vmul.f32 %v59, 0.032258064
  %v66 = vmul.f32 %v62, 0.032258064
  %v67 = vrsqrt.pop %v63
  %v68 = vmul.f32 %v63, %v67
  %vm69 = vcmp.eq.f32.partialorder %v63, inf
  %v70 = vsel %vm69, %v63, %v68
  %vm71 = vcmp.eq.f32.partialorder %v63, 0.0
  %v72 = vand.u32 %v63, 2147483648
  %v73 = vsel %vm71, %v72, %v70
  %v74 = vrsqrt.pop %v64
  %v75 = vmul.f32 %v64, %v74
  %vm76 = vcmp.eq.f32.partialorder %v64, inf
  %v77 = vsel %vm76, %v64, %v75
  %vm78 = vcmp.eq.f32.partialorder %v64, 0.0
  %v79 = vand.u32 %v64, 2147483648
  %v80 = vsel %vm78, %v79, %v77
  %v81 = vrsqrt.pop %v65
  %v82 = vmul.f32 %v65, %v81
  %vm83 = vcmp.eq.f32.partialorder %v65, inf
  %v84 = vsel %vm83, %v65, %v82
  %vm85 = vcmp.eq.f32.partialorder %v65, 0.0
  %v86 = vand.u32 %v65, 2147483648
  %v87 = vsel %vm85, %v86, %v84
  %v88 = vrsqrt.pop %v66
  %v89 = vmul.f32 %v66, %v88
  %vm90 = vcmp.eq.f32.partialorder %v66, inf
  %v91 = vsel %vm90, %v66, %v89
  %vm92 = vcmp.eq.f32.partialorder %v66, 0.0
  %v93 = vand.u32 %v66, 2147483648
  %v94 = vsel %vm92, %v93, %v91
  %v95 = vadd.f32 %v73, 1e-06
  %v96 = vadd.f32 %v80, 1e-06
  %v97 = vadd.f32 %v87, 1e-06
  %v98 = vadd.f32 %v94, 1e-06
  %v99 = vrcp.pop %v95
  %v100 = vrcp.pop %v96
  %v101 = vrcp.pop %v97
  %v102 = vrcp.pop %v98
  %v103 = vld [vmem:[%s1] sm:$0x1]
  %v105 = vlaneseq
  %v106 = vshrl.u32 %v105, 7
  %v107 = vsub.s32 0, %v106
  %v108 = vrot.slane %v103, %v107
  %v110 = vmul.f32 %v108, %v43
  %v111 = vmul.f32 %v108, %v44
  %v112 = vmul.f32 %v108, %v45
  %v113 = vmul.f32 %v108, %v46
  %v114 = vmul.f32 %v110, %v99
  %v115 = vmul.f32 %v111, %v100
  %v116 = vmul.f32 %v112, %v101
  %v117 = vmul.f32 %v113, %v102
  %v118 = vld [vmem:[%s2] sm:$0x1]
  %v120 = vlaneseq
  %v121 = vshrl.u32 %v120, 7
  %v122 = vsub.s32 0, %v121
  %v123 = vrot.slane %v118, %v122
  %v125 = vadd.f32 %v114, %v123
  %v126 = vadd.f32 %v115, %v123
  %v127 = vadd.f32 %v116, %v123
  %v128 = vadd.f32 %v117, %v123
  %v129 = vpack.c.bf16 %v126, %v125
  %v130 = vpack.c.bf16 %v128, %v127
  %v131 = vld [vmem:[%s3] sm:$0xf]
  %v132 = vld [vmem:[%s3 + $0x4] sm:$0xf]
  %v133 = vld [vmem:[%s3 + $0x8] sm:$0xf]
  %v134 = vld [vmem:[%s3 + $0xc] sm:$0xf]
  %v135 = vld [vmem:[%s4] sm:$0x1]
  %v137 = vlaneseq
  %v138 = vshrl.u32 %v137, 7
  %v139 = vsub.s32 0, %v138
  %v140 = vrot.slane %v135, %v139
  %v146 = vunpack.c.l.b16 %v131
  %v147 = vunpack.c.l.b16 %v132
  %v148 = vunpack.c.l.b16 %v133
  %v149 = vunpack.c.l.b16 %v134
  %v150 = vpack.c.b16 %v147, %v146
  %v151 = vpack.c.b16 %v149, %v148
  %v155 = vsel %vm25, %v129, 0
  %v158 = vsel %vm25, %v130, 0
  %160 = vmatprep.subr.bf16.mxu0 0
  %161 = vmatpush1.bf16.msra.mxu0 %v150
  %162 = vmatprep.subr.bf16.mxu0 0
  %163 = vmatpush1.bf16.msra.mxu0 %v151
  %164 = vmatprep.subr.bf16.mxu0 0
  %165 = vmatpush1.bf16.msra.mxu0 0
  %166 = vmatprep.subr.bf16.mxu0 0
  %167 = vmatpush1.bf16.msra.mxu0 0
  %168 = vmatprep.subr.bf16.mxu0 0
  %169 = vmatpush1.bf16.msra.mxu0 0
  %170 = vmatprep.subr.bf16.mxu0 0
  %171 = vmatpush1.bf16.msra.mxu0 0
  %172 = vmatprep.subr.bf16.mxu0 0
  %173 = vmatpush1.bf16.msra.mxu0 0
  %174 = vmatprep.subr.bf16.mxu0 0
  %175 = vmatpush1.bf16.msra.mxu0 0
  %176 = vmatprep.subr.bf16.mxu0 0
  %177 = vmatpush1.bf16.msra.mxu0 0
  %178 = vmatprep.subr.bf16.mxu0 0
  %179 = vmatpush1.bf16.msra.mxu0 0
  %180 = vmatprep.subr.bf16.mxu0 0
  %181 = vmatpush1.bf16.msra.mxu0 0
  %182 = vmatprep.subr.bf16.mxu0 0
  %183 = vmatpush1.bf16.msra.mxu0 0
  %184 = vmatprep.subr.bf16.mxu0 0
  %185 = vmatpush1.bf16.msra.mxu0 0
  %186 = vmatprep.subr.bf16.mxu0 0
  %187 = vmatpush1.bf16.msra.mxu0 0
  %188 = vmatprep.subr.bf16.mxu0 0
  %189 = vmatpush1.bf16.msra.mxu0 0
  %190 = vmatprep.subr.bf16.mxu0 0
  %191 = vmatpush1.bf16.msra.mxu0 0
  %192 = vmatprep.mubr.bf16.mxu0 0
  %193 = vmatmul.mubr.bf16.gmra.mrb[0].mxu0 %v155
  %v194 = vpop.f32.mrb[0].mxu0
  %v195 = vadd.f32 %v140, %v194
  %v196 = vpop.f32.mrb[0].mxu0
  %v197 = vpop.f32.mrb[0].mxu0
  %v198 = vadd.f32 %v140, %v197
  %v199 = vpop.f32.mrb[0].mxu0
  %200 = vmatprep.mubr.bf16.mxu0 0
  %201 = vmatmul.mubr.bf16.gmra.mrb[0].mxu0 %v158
  %v202 = vpop.f32.mrb[0].mxu0
  %v203 = vadd.f32 %v140, %v202
  %v204 = vpop.f32.mrb[0].mxu0
  %v205 = vpop.f32.mrb[0].mxu0
  %v206 = vadd.f32 %v140, %v205
  %v207 = vpop.f32.mrb[0].mxu0
  %208 = vdwg.mxu0
  %v209 = vpack.c.bf16 %v198, %v195
  %v210 = vpack.c.bf16 %v206, %v203
  %v213 = vunpack.c.l.b16 %v209
  %v214 = vunpack.c.h.b16 %v209
  %v215 = vunpack.c.l.b16 %v210
  %v216 = vunpack.c.h.b16 %v210
  %v217 = vpack.c.b16 %v213, %v213
  %v218 = vpack.c.b16 %v214, %v214
  %v219 = vpack.c.b16 %v215, %v215
  %v220 = vpack.c.b16 %v216, %v216
  %vm225 = vcmask 781312
  %226 = vst.msk [vmem:[%s5] sm:$0xf] %vm225, %v217
  %227 = vst.msk [vmem:[%s5 + $0x4] sm:$0xf] %vm225, %v218
  %228 = vst.msk [vmem:[%s5 + $0x8] sm:$0xf] %vm225, %v219
  %229 = vst.msk [vmem:[%s5 + $0xc] sm:$0xf] %vm225, %v220
  // Predicated region
  $region22: #{encoder_bottom_up_forward.15} parent=0 // pred_check
    _
  $region23: #{encoder_bottom_up_forward.15} parent=0 // pred_check_branch
    %231 = sbr.rel (0) target = $region25
  $region24: #{encoder_bottom_up_forward.15} parent=0 // pred_region
    _
  $region25: #{encoder_bottom_up_forward.15} parent=0 // pred_fallthru
    _
  // Predicated region
  $region26: #{encoder_bottom_up_forward.15} parent=0 // pred_check
    _
  $region27: #{encoder_bottom_up_forward.15} parent=0 // pred_check_branch
    %233 = sbr.rel (0) target = $region29
  $region28: #{encoder_bottom_up_forward.15} parent=0 // pred_region
    _
  $region29: #{encoder_bottom_up_forward.15} parent=0 // pred_fallthru
    _

// kernel: encoder_bottom_up_forward.16
$region0: #{encoder_bottom_up_forward.16}
  #allocation0 [shape = 'u32[]', space=smem, size = 0x4, offset = 0x4, fixed_abs, tag = 'smem constant byte address 0x4 - core index']
  #allocation1 [shape = 'u32[144,128]{1,0:T(1,128)}', space=vmem, size = 0x12000, scoped, tag = 'internal scratch']
  %s0 = inlined_call_operand.vmem [shape: bf16[2,16,32], index: 0, kind: input, shape index: {}]
  %s1 = inlined_call_operand.vmem [shape: bf16[2,16,32], index: 1, kind: input, shape index: {}]
  %s2 = inlined_call_operand.vmem [shape: bf16[2,16,32], index: 2, kind: input, shape index: {}]
  %s3 = inlined_call_operand.vmem [shape: bf16[2,16,32], index: 3, kind: output, shape index: {}]
  %s4 = sld [smem:[#allocation0]]
  $region45: #{encoder_bottom_up_forward.16} parent=0
    _
  %s6 = ssub.s32 1, %s4
  %s7 = scalar_select 0, %s6, %s4
  loop: start=0, step=1, limit=4
  $region2: #{encoder_bottom_up_forward.16} parent=0 // loop_pre_header
    _
  $region3: #{encoder_bottom_up_forward.16} parent=0 // loop_header
    %s9 = sphi 0, %s13
    %p10 = scmp.ge.s32.totalorder %s9, 4
    %s19 = sphi 0, %s21
    %s22 = sphi 0, %s19
    %s23 = sphi 0, %s22
    %s39 = sphi 0, %s23
    %s45 = sphi 0, %s47
    %s48 = sphi 0, %s45
    %s49 = sphi 0, %s48
    %s65 = sphi 0, %s49
    %s71 = sphi 0, %s73
    %s74 = sphi 0, %s71
    %s75 = sphi 0, %s74
    %s91 = sphi 0, %s75
    %s97 = sphi 0, %s99
    %s100 = sphi 0, %s97
    %s101 = sphi 0, %s100
    %s117 = sphi 0, %s101
  $region4: #{encoder_bottom_up_forward.16} parent=0 // loop_header_branch
    %12 = sbr.rel (%p10) target = $region8
  $region5: #{encoder_bottom_up_forward.16} parent=0 // loop_body
    %s14 = ssub.s32 %s9, 1
    %s15 = ssub.s32 %s9, 2
    %s16 = sadd.s32 %s9, 1
    %s17 = ssub.s32 %s9, %s16
    %p18 = scmp.eq.s32.totalorder %s17, 0
    %s20 = sadd.s32 %s19, 1
    %s21 = scalar_select %p18, %s19, %s20
    %p24 = pneg %p18
    %p25 = scmp.eq.s32.totalorder %s9, 1
    %p26 = por %p24, %p25
    %p27 = scmp.ne.s32.totalorder %s19, %s22
    %p28 = scmp.eq.s32.totalorder %s9, 0
    %p29 = por %p27, %p28
    %p30 = scmp.ne.s32.totalorder %s19, %s22
    %p31 = scmp.eq.s32.totalorder %s14, 1
    %p32 = por %p30, %p31
    %p33 = scmp.ne.s32.totalorder %s22, %s23
    %p34 = scmp.eq.s32.totalorder %s14, 0
    %p35 = por %p33, %p34
    %p36 = scmp.ne.s32.totalorder %s22, %s23
    %p37 = scmp.eq.s32.totalorder %s15, 1
    %p38 = por %p36, %p37
    %p40 = scmp.ne.s32.totalorder %s23, %s39
    %p41 = scmp.eq.s32.totalorder %s15, 0
    %p42 = por %p40, %p41
    %s43 = ssub.s32 %s9, %s16
    %p44 = scmp.eq.s32.totalorder %s43, 0
    %s46 = sadd.s32 %s45, 1
    %s47 = scalar_select %p44, %s45, %s46
    %p50 = pneg %p44
    %p51 = scmp.eq.s32.totalorder %s9, 1
    %p52 = por %p50, %p51
    %p53 = scmp.ne.s32.totalorder %s45, %s48
    %p54 = scmp.eq.s32.totalorder %s9, 0
    %p55 = por %p53, %p54
    %p56 = scmp.ne.s32.totalorder %s45, %s48
    %p57 = scmp.eq.s32.totalorder %s14, 1
    %p58 = por %p56, %p57
    %p59 = scmp.ne.s32.totalorder %s48, %s49
    %p60 = scmp.eq.s32.totalorder %s14, 0
    %p61 = por %p59, %p60
    %p62 = scmp.ne.s32.totalorder %s48, %s49
    %p63 = scmp.eq.s32.totalorder %s15, 1
    %p64 = por %p62, %p63
    %p66 = scmp.ne.s32.totalorder %s49, %s65
    %p67 = scmp.eq.s32.totalorder %s15, 0
    %p68 = por %p66, %p67
    %s69 = ssub.s32 %s9, %s16
    %p70 = scmp.eq.s32.totalorder %s69, 0
    %s72 = sadd.s32 %s71, 1
    %s73 = scalar_select %p70, %s71, %s72
    %p76 = pneg %p70
    %p77 = scmp.eq.s32.totalorder %s9, 1
    %p78 = por %p76, %p77
    %p79 = scmp.ne.s32.totalorder %s71, %s74
    %p80 = scmp.eq.s32.totalorder %s9, 0
    %p81 = por %p79, %p80
    %p82 = scmp.ne.s32.totalorder %s71, %s74
    %p83 = scmp.eq.s32.totalorder %s14, 1
    %p84 = por %p82, %p83
    %p85 = scmp.ne.s32.totalorder %s74, %s75
    %p86 = scmp.eq.s32.totalorder %s14, 0
    %p87 = por %p85, %p86
    %p88 = scmp.ne.s32.totalorder %s74, %s75
    %p89 = scmp.eq.s32.totalorder %s15, 1
    %p90 = por %p88, %p89
    %p92 = scmp.ne.s32.totalorder %s75, %s91
    %p93 = scmp.eq.s32.totalorder %s15, 0
    %p94 = por %p92, %p93
    %s95 = ssub.s32 %s9, %s16
    %p96 = scmp.eq.s32.totalorder %s95, 0
    %s98 = sadd.s32 %s97, 1
    %s99 = scalar_select %p96, %s97, %s98
    %p102 = pneg %p96
    %p103 = scmp.eq.s32.totalorder %s9, 1
    %p104 = por %p102, %p103
    %p105 = scmp.ne.s32.totalorder %s97, %s100
    %p106 = scmp.eq.s32.totalorder %s9, 0
    %p107 = por %p105, %p106
    %p108 = scmp.ne.s32.totalorder %s97, %s100
    %p109 = scmp.eq.s32.totalorder %s14, 1
    %p110 = por %p108, %p109
    %p111 = scmp.ne.s32.totalorder %s100, %s101
    %p112 = scmp.eq.s32.totalorder %s14, 0
    %p113 = por %p111, %p112
    %p114 = scmp.ne.s32.totalorder %s100, %s101
    %p115 = scmp.eq.s32.totalorder %s15, 1
    %p116 = por %p114, %p115
    %p118 = scmp.ne.s32.totalorder %s101, %s117
    %p119 = scmp.eq.s32.totalorder %s15, 0
    %p120 = por %p118, %p119
    %p121 = scmp.le.s32.totalorder 1, %s9
    %p122 = scmp.lt.s32.totalorder %s9, 3
    %p123 = pnand %p121, %p122
    %p124 = pneg %p123
    // Predicated region
    $region9: #{encoder_bottom_up_forward.16} parent=5 // pred_check
      _
    $region10: #{encoder_bottom_up_forward.16} parent=5 // pred_check_branch
      %126 = sbr.rel (%p123) target = $region12
    $region11: #{encoder_bottom_up_forward.16} parent=5 // pred_region
      %s127 = ssub.s32 %s9, 1
    $region12: #{encoder_bottom_up_forward.16} parent=5 // pred_fallthru
      _
    %p128 = scmp.lt.s32.totalorder %s9, 2
    // Predicated region
    $region13: #{encoder_bottom_up_forward.16} parent=5 // pred_check
      %p129 = pneg %p128
    $region14: #{encoder_bottom_up_forward.16} parent=5 // pred_check_branch
      %131 = sbr.rel (%p129) target = $region16
    $region15: #{encoder_bottom_up_forward.16} parent=5 // pred_region
      // Predicated region
      $region17: #{encoder_bottom_up_forward.16} parent=15 // pred_check
        %p132 = pneg %p29
      $region18: #{encoder_bottom_up_forward.16} parent=15 // pred_check_branch
        %134 = sbr.rel (%p132) target = $region20
      $region19: #{encoder_bottom_up_forward.16} parent=15 // pred_region
        %p135 = scmp.lt.s32.totalorder %s9, 1
        %s136 = scalar_select %p135, %s9, 1
        %s137 = smul.addr %s136, 2
        %s138 = smul.addr %s137, 4
        %s139 = scalar_lea.vmem %s0, %s138
      $region20: #{encoder_bottom_up_forward.16} parent=15 // pred_fallthru
        _
      // Predicated region
      $region21: #{encoder_bottom_up_forward.16} parent=15 // pred_check
        %p140 = pneg %p55
      $region22: #{encoder_bottom_up_forward.16} parent=15 // pred_check_branch
        %142 = sbr.rel (%p140) target = $region24
      $region23: #{encoder_bottom_up_forward.16} parent=15 // pred_region
        %p143 = scmp.lt.s32.totalorder %s9, 1
        %s144 = scalar_select %p143, %s9, 1
        %s145 = smul.addr %s144, 2
        %s146 = smul.addr %s145, 4
        %s147 = scalar_lea.vmem %s1, %s146
      $region24: #{encoder_bottom_up_forward.16} parent=15 // pred_fallthru
        _
      // Predicated region
      $region25: #{encoder_bottom_up_forward.16} parent=15 // pred_check
        %p148 = pneg %p81
      $region26: #{encoder_bottom_up_forward.16} parent=15 // pred_check_branch
        %150 = sbr.rel (%p148) target = $region28
      $region27: #{encoder_bottom_up_forward.16} parent=15 // pred_region
        %p151 = scmp.lt.s32.totalorder %s9, 1
        %s152 = scalar_select %p151, %s9, 1
        %s153 = smul.addr %s152, 2
        %s154 = smul.addr %s153, 4
        %s155 = scalar_lea.vmem %s2, %s154
      $region28: #{encoder_bottom_up_forward.16} parent=15 // pred_fallthru
        _
    $region16: #{encoder_bottom_up_forward.16} parent=5 // pred_fallthru
      _
    %p156 = scmp.le.s32.totalorder 1, %s9
    %p157 = scmp.lt.s32.totalorder %s9, 3
    %p158 = pnand %p156, %p157
    %p159 = pneg %p158
    // Predicated region
    $region29: #{encoder_bottom_up_forward.16} parent=5 // pred_check
      _
    $region30: #{encoder_bottom_up_forward.16} parent=5 // pred_check_branch
      %161 = sbr.rel (%p158) target = $region32
    $region31: #{encoder_bottom_up_forward.16} parent=5 // pred_region
      %s162 = ssub.s32 %s9, 1
      %p163 = scmp.lt.s32.totalorder %s14, 1
      %s164 = scalar_select %p163, %s14, 1
      %s165 = smul.addr %s164, 2
      %s166 = smul.addr %s165, 4
      %s167 = scalar_lea.vmem %s0, %s166
      %p168 = pneg %p35
      %p169 = pneg %p32
      %p170 = scmp.lt.s32.totalorder %s14, 1
      %s171 = scalar_select %p170, %s14, 1
      %s172 = smul.addr %s171, 2
      %s173 = smul.addr %s172, 4
      %s174 = scalar_lea.vmem %s1, %s173
      %p175 = pneg %p61
      %p176 = pneg %p58
      %p177 = scmp.lt.s32.totalorder %s14, 1
      %s178 = scalar_select %p177, %s14, 1
      %s179 = smul.addr %s178, 2
      %s180 = smul.addr %s179, 4
      %s181 = scalar_lea.vmem %s2, %s180
      %p182 = pneg %p87
      %p183 = pneg %p84
      %p184 = pneg %p113
      %p185 = pneg %p110
      %p186 = scmp.lt.s32.totalorder %s14, 1
      %s187 = scalar_select %p186, %s14, 1
      %s188 = smul.addr %s187, 2
      %s189 = smul.addr %s188, 4
      %s190 = scalar_lea.vmem %s3, %s189
      %p191 = scmp.lt.s32.totalorder %s14, 1
      %s192 = scalar_select %p191, %s14, 1
      %s193 = smul.addr %s192, 2
      %s194 = smul.addr %s193, 4
      %s195 = scalar_lea.vmem %s0, %s194
      %p196 = scmp.lt.s32.totalorder %s14, 1
      %s197 = scalar_select %p196, %s14, 1
      %s198 = smul.addr %s197, 2
      %s199 = smul.addr %s198, 4
      %s200 = scalar_lea.vmem %s1, %s199
      %p201 = scmp.lt.s32.totalorder %s14, 1
      %s202 = scalar_select %p201, %s14, 1
      %s203 = smul.addr %s202, 2
      %s204 = smul.addr %s203, 4
      %s205 = scalar_lea.vmem %s2, %s204
      %p206 = scmp.lt.s32.totalorder %s14, 1
      %s207 = scalar_select %p206, %s14, 1
      %s208 = smul.addr %s207, 2
      %s209 = smul.addr %s208, 4
      %s210 = scalar_lea.vmem %s3, %s209
      %v212 = vld [vmem:[%s195] sm:$0xf]
      %v213 = vld [vmem:[%s195 + $0x4] sm:$0xf]
      %v214 = vld [vmem:[%s200] sm:$0xf]
      %v215 = vld [vmem:[%s200 + $0x4] sm:$0xf]
      %v216 = vld [vmem:[%s205] sm:$0xf]
      %v217 = vld [vmem:[%s205 + $0x4] sm:$0xf]
      %v220 = vunpack.c.l.b16 %v212
      %v221 = vunpack.c.l.b16 %v213
      %v222 = vpack.c.b16 %v221, %v220
      %v225 = vunpack.c.l.b16 %v214
      %v226 = vunpack.c.l.b16 %v215
      %v227 = vpack.c.b16 %v226, %v225
      %vm228 = vcmask 64512
      %v230 = vsel %vm228, %v222, 0
      %v233 = vsel %vm228, %v227, 0
      %235 = vmatprep.subr.bf16.mxu0 0
      %236 = vmatpush1.bf16.xpose.msra.mxu0 %v233
      %237 = vmatprep.subr.bf16.mxu0 0
      %238 = vmatpush1.bf16.xpose.msra.mxu0 0
      %239 = vmatprep.subr.bf16.mxu0 0
      %240 = vmatpush1.bf16.xpose.msra.mxu0 0
      %241 = vmatprep.subr.bf16.mxu0 0
      %242 = vmatpush1.bf16.xpose.msra.mxu0 0
      %243 = vmatprep.subr.bf16.mxu0 0
      %244 = vmatpush1.bf16.xpose.msra.mxu0 0
      %245 = vmatprep.subr.bf16.mxu0 0
      %246 = vmatpush1.bf16.xpose.msra.mxu0 0
      %247 = vmatprep.subr.bf16.mxu0 0
      %248 = vmatpush1.bf16.xpose.msra.mxu0 0
      %249 = vmatprep.subr.bf16.mxu0 0
      %250 = vmatpush1.bf16.xpose.msra.mxu0 0
      %251 = vmatprep.subr.bf16.mxu0 0
      %252 = vmatpush1.bf16.xpose.msra.mxu0 0
      %253 = vmatprep.subr.bf16.mxu0 0
      %254 = vmatpush1.bf16.xpose.msra.mxu0 0
      %255 = vmatprep.subr.bf16.mxu0 0
      %256 = vmatpush1.bf16.xpose.msra.mxu0 0
      %257 = vmatprep.subr.bf16.mxu0 0
      %258 = vmatpush1.bf16.xpose.msra.mxu0 0
      %259 = vmatprep.subr.bf16.mxu0 0
      %260 = vmatpush1.bf16.xpose.msra.mxu0 0
      %261 = vmatprep.subr.bf16.mxu0 0
      %262 = vmatpush1.bf16.xpose.msra.mxu0 0
      %263 = vmatprep.subr.bf16.mxu0 0
      %264 = vmatpush1.bf16.xpose.msra.mxu0 0
      %265 = vmatprep.subr.bf16.mxu0 0
      %266 = vmatpush1.bf16.xpose.msra.mxu0 0
      %267 = vmatprep.mubr.bf16.mxu0 0
      %268 = vmatmul.mubr.bf16.gmra.mrb[0].mxu0 %v230
      %v269 = vpop.f32.mrb[0].mxu0
      %v270 = vadd.f32 0.0, %v269
      %v271 = vpop.f32.mrb[0].mxu0
      %v272 = vpop.f32.mrb[0].mxu0
      %v273 = vadd.f32 0.0, %v272
      %v274 = vpop.f32.mrb[0].mxu0
      %275 = vdwg.mxu0
      %vm276 = vcmask 130048
      %v277 = vsel %vm276, %v270, -inf
      %278 = vmax.xlane.f32.xlu0 %v277
      %v279 = vpop.xlane.xlu0 %278
      %v280 = vsel %vm276, %v273, -inf
      %281 = vmax.xlane.f32.xlu0 %v280
      %v282 = vpop.xlane.xlu0 %281
      %v283 = vsub.f32 %v270, %v279
      %v284 = vsub.f32 %v273, %v282
      %v285 = vmul.f32 %v283, 1.442695
      %v286 = vpow.pop %v285
      %v287 = vmul.f32 %v284, 1.442695
      %v288 = vpow.pop %v287
      %v289 = vsel %vm276, %v286, 0.0
      %290 = vadd.xlane.f32.xlu0 %v289
      %v291 = vpop.xlane.xlu0 %290
      %v292 = vsel %vm276, %v288, 0.0
      %293 = vadd.xlane.f32.xlu0 %v292
      %v294 = vpop.xlane.xlu0 %293
      %v295 = vrcp.pop %v291
      %v296 = vrcp.pop %v294
      %v297 = vmul.f32 %v286, %v295
      %v298 = vmul.f32 %v288, %v296
      %v299 = vpack.c.bf16 %v298, %v297
      %v302 = vunpack.c.l.b16 %v216
      %v303 = vunpack.c.l.b16 %v217
      %v304 = vpack.c.b16 %v303, %v302
      %v307 = vsel %vm276, %v299, 0
      %309 = vmatprep.subr.bf16.mxu0 0
      %310 = vmatpush1.bf16.msra.mxu0 %v304
      %311 = vmatprep.subr.bf16.mxu0 0
      %312 = vmatpush1.bf16.msra.mxu0 0
      %313 = vmatprep.subr.bf16.mxu0 0
      %314 = vmatpush1.bf16.msra.mxu0 0
      %315 = vmatprep.subr.bf16.mxu0 0
      %316 = vmatpush1.bf16.msra.mxu0 0
      %317 = vmatprep.subr.bf16.mxu0 0
      %318 = vmatpush1.bf16.msra.mxu0 0
      %319 = vmatprep.subr.bf16.mxu0 0
      %320 = vmatpush1.bf16.msra.mxu0 0
      %321 = vmatprep.subr.bf16.mxu0 0
      %322 = vmatpush1.bf16.msra.mxu0 0
      %323 = vmatprep.subr.bf16.mxu0 0
      %324 = vmatpush1.bf16.msra.mxu0 0
      %325 = vmatprep.subr.bf16.mxu0 0
      %326 = vmatpush1.bf16.msra.mxu0 0
      %327 = vmatprep.subr.bf16.mxu0 0
      %328 = vmatpush1.bf16.msra.mxu0 0
      %329 = vmatprep.subr.bf16.mxu0 0
      %330 = vmatpush1.bf16.msra.mxu0 0
      %331 = vmatprep.subr.bf16.mxu0 0
      %332 = vmatpush1.bf16.msra.mxu0 0
      %333 = vmatprep.subr.bf16.mxu0 0
      %334 = vmatpush1.bf16.msra.mxu0 0
      %335 = vmatprep.subr.bf16.mxu0 0
      %336 = vmatpush1.bf16.msra.mxu0 0
      %337 = vmatprep.subr.bf16.mxu0 0
      %338 = vmatpush1.bf16.msra.mxu0 0
      %339 = vmatprep.subr.bf16.mxu0 0
      %340 = vmatpush1.bf16.msra.mxu0 0
      %341 = vmatprep.mubr.bf16.mxu0 0
      %342 = vmatmul.mubr.bf16.gmra.mrb[0].mxu0 %v307
      %v343 = vpop.f32.mrb[0].mxu0
      %v344 = vadd.f32 0.0, %v343
      %v345 = vpop.f32.mrb[0].mxu0
      %v346 = vpop.f32.mrb[0].mxu0
      %v347 = vadd.f32 0.0, %v346
      %v348 = vpop.f32.mrb[0].mxu0
      %349 = vdwg.mxu0
      %350 = vrot.lane.b32.xlu0 %v222, 120
      %v351 = vpop.permute.xlu0 %350
      %352 = vrot.lane.b32.xlu0 %v227, 120
      %v353 = vpop.permute.xlu0 %352
      %v355 = vsel %vm228, %v351, 0
      %v358 = vsel %vm228, %v353, 0
      %360 = vmatprep.subr.bf16.mxu0 0
      %361 = vmatpush1.bf16.xpose.msra.mxu0 %v358
      %362 = vmatprep.subr.bf16.mxu0 0
      %363 = vmatpush1.bf16.xpose.msra.mxu0 0
      %364 = vmatprep.subr.bf16.mxu0 0
      %365 = vmatpush1.bf16.xpose.msra.mxu0 0
      %366 = vmatprep.subr.bf16.mxu0 0
      %367 = vmatpush1.bf16.xpose.msra.mxu0 0
      %368 = vmatprep.subr.bf16.mxu0 0
      %369 = vmatpush1.bf16.xpose.msra.mxu0 0
      %370 = vmatprep.subr.bf16.mxu0 0
      %371 = vmatpush1.bf16.xpose.msra.mxu0 0
      %372 = vmatprep.subr.bf16.mxu0 0
      %373 = vmatpush1.bf16.xpose.msra.mxu0 0
      %374 = vmatprep.subr.bf16.mxu0 0
      %375 = vmatpush1.bf16.xpose.msra.mxu0 0
      %376 = vmatprep.subr.bf16.mxu0 0
      %377 = vmatpush1.bf16.xpose.msra.mxu0 0
      %378 = vmatprep.subr.bf16.mxu0 0
      %379 = vmatpush1.bf16.xpose.msra.mxu0 0
      %380 = vmatprep.subr.bf16.mxu0 0
      %381 = vmatpush1.bf16.xpose.msra.mxu0 0
      %382 = vmatprep.subr.bf16.mxu0 0
      %383 = vmatpush1.bf16.xpose.msra.mxu0 0
      %384 = vmatprep.subr.bf16.mxu0 0
      %385 = vmatpush1.bf16.xpose.msra.mxu0 0
      %386 = vmatprep.subr.bf16.mxu0 0
      %387 = vmatpush1.bf16.xpose.msra.mxu0 0
      %388 = vmatprep.subr.bf16.mxu0 0
      %389 = vmatpush1.bf16.xpose.msra.mxu0 0
      %390 = vmatprep.subr.bf16.mxu0 0
      %391 = vmatpush1.bf16.xpose.msra.mxu0 0
      %392 = vmatprep.mubr.bf16.mxu0 0
      %393 = vmatmul.mubr.bf16.gmra.mrb[0].mxu0 %v355
      %v394 = vpop.f32.mrb[0].mxu0
      %v395 = vadd.f32 0.0, %v394
      %v396 = vpop.f32.mrb[0].mxu0
      %v397 = vpop.f32.mrb[0].mxu0
      %v398 = vadd.f32 0.0, %v397
      %v399 = vpop.f32.mrb[0].mxu0
      %400 = vdwg.mxu0
      %v401 = vsel %vm276, %v395, -inf
      %402 = vmax.xlane.f32.xlu0 %v401
      %v403 = vpop.xlane.xlu0 %402
      %v404 = vsel %vm276, %v398, -inf
      %405 = vmax.xlane.f32.xlu0 %v404
      %v406 = vpop.xlane.xlu0 %405
      %v407 = vsub.f32 %v395, %v403
      %v408 = vsub.f32 %v398, %v406
      %v409 = vmul.f32 %v407, 1.442695
      %v410 = vpow.pop %v409
      %v411 = vmul.f32 %v408, 1.442695
      %v412 = vpow.pop %v411
      %v413 = vsel %vm276, %v410, 0.0
      %414 = vadd.xlane.f32.xlu0 %v413
      %v415 = vpop.xlane.xlu0 %414
      %v416 = vsel %vm276, %v412, 0.0
      %417 = vadd.xlane.f32.xlu0 %v416
      %v418 = vpop.xlane.xlu0 %417
      %v419 = vrcp.pop %v415
      %v420 = vrcp.pop %v418
      %v421 = vmul.f32 %v410, %v419
      %v422 = vmul.f32 %v412, %v420
      %v423 = vpack.c.bf16 %v422, %v421
      %424 = vrot.lane.b32.xlu0 %v304, 120
      %v425 = vpop.permute.xlu0 %424
      %v428 = vsel %vm276, %v423, 0
      %430 = vmatprep.subr.bf16.mxu0 0
      %431 = vmatpush1.bf16.msra.mxu0 %v425
      %432 = vmatprep.subr.bf16.mxu0 0
      %433 = vmatpush1.bf16.msra.mxu0 0
      %434 = vmatprep.subr.bf16.mxu0 0
      %435 = vmatpush1.bf16.msra.mxu0 0
      %436 = vmatprep.subr.bf16.mxu0 0
      %437 = vmatpush1.bf16.msra.mxu0 0
      %438 = vmatprep.subr.bf16.mxu0 0
      %439 = vmatpush1.bf16.msra.mxu0 0
      %440 = vmatprep.subr.bf16.mxu0 0
      %441 = vmatpush1.bf16.msra.mxu0 0
      %442 = vmatprep.subr.bf16.mxu0 0
      %443 = vmatpush1.bf16.msra.mxu0 0
      %444 = vmatprep.subr.bf16.mxu0 0
      %445 = vmatpush1.bf16.msra.mxu0 0
      %446 = vmatprep.subr.bf16.mxu0 0
      %447 = vmatpush1.bf16.msra.mxu0 0
      %448 = vmatprep.subr.bf16.mxu0 0
      %449 = vmatpush1.bf16.msra.mxu0 0
      %450 = vmatprep.subr.bf16.mxu0 0
      %451 = vmatpush1.bf16.msra.mxu0 0
      %452 = vmatprep.subr.bf16.mxu0 0
      %453 = vmatpush1.bf16.msra.mxu0 0
      %454 = vmatprep.subr.bf16.mxu0 0
      %455 = vmatpush1.bf16.msra.mxu0 0
      %456 = vmatprep.subr.bf16.mxu0 0
      %457 = vmatpush1.bf16.msra.mxu0 0
      %458 = vmatprep.subr.bf16.mxu0 0
      %459 = vmatpush1.bf16.msra.mxu0 0
      %460 = vmatprep.subr.bf16.mxu0 0
      %461 = vmatpush1.bf16.msra.mxu0 0
      %462 = vmatprep.mubr.bf16.mxu0 0
      %463 = vmatmul.mubr.bf16.gmra.mrb[0].mxu0 %v428
      %v464 = vpop.f32.mrb[0].mxu0
      %v465 = vadd.f32 0.0, %v464
      %v466 = vpop.f32.mrb[0].mxu0
      %v467 = vpop.f32.mrb[0].mxu0
      %v468 = vadd.f32 0.0, %v467
      %v469 = vpop.f32.mrb[0].mxu0
      %470 = vdwg.mxu0
      %471 = vrot.lane.b32.xlu0 %v222, 112
      %v472 = vpop.permute.xlu0 %471
      %473 = vrot.lane.b32.xlu0 %v227, 112
      %v474 = vpop.permute.xlu0 %473
      %v476 = vsel %vm228, %v472, 0
      %v479 = vsel %vm228, %v474, 0
      %481 = vmatprep.subr.bf16.mxu0 0
      %482 = vmatpush1.bf16.xpose.msra.mxu0 %v479
      %483 = vmatprep.subr.bf16.mxu0 0
      %484 = vmatpush1.bf16.xpose.msra.mxu0 0
      %485 = vmatprep.subr.bf16.mxu0 0
      %486 = vmatpush1.bf16.xpose.msra.mxu0 0
      %487 = vmatprep.subr.bf16.mxu0 0
      %488 = vmatpush1.bf16.xpose.msra.mxu0 0
      %489 = vmatprep.subr.bf16.mxu0 0
      %490 = vmatpush1.bf16.xpose.msra.mxu0 0
      %491 = vmatprep.subr.bf16.mxu0 0
      %492 = vmatpush1.bf16.xpose.msra.mxu0 0
      %493 = vmatprep.subr.bf16.mxu0 0
      %494 = vmatpush1.bf16.xpose.msra.mxu0 0
      %495 = vmatprep.subr.bf16.mxu0 0
      %496 = vmatpush1.bf16.xpose.msra.mxu0 0
      %497 = vmatprep.subr.bf16.mxu0 0
      %498 = vmatpush1.bf16.xpose.msra.mxu0 0
      %499 = vmatprep.subr.bf16.mxu0 0
      %500 = vmatpush1.bf16.xpose.msra.mxu0 0
      %501 = vmatprep.subr.bf16.mxu0 0
      %502 = vmatpush1.bf16.xpose.msra.mxu0 0
      %503 = vmatprep.subr.bf16.mxu0 0
      %504 = vmatpush1.bf16.xpose.msra.mxu0 0
      %505 = vmatprep.subr.bf16.mxu0 0
      %506 = vmatpush1.bf16.xpose.msra.mxu0 0
      %507 = vmatprep.subr.bf16.mxu0 0
      %508 = vmatpush1.bf16.xpose.msra.mxu0 0
      %509 = vmatprep.subr.bf16.mxu0 0
      %510 = vmatpush1.bf16.xpose.msra.mxu0 0
      %511 = vmatprep.subr.bf16.mxu0 0
      %512 = vmatpush1.bf16.xpose.msra.mxu0 0
      %513 = vmatprep.mubr.bf16.mxu0 0
      %514 = vmatmul.mubr.bf16.gmra.mrb[0].mxu0 %v476
      %v515 = vpop.f32.mrb[0].mxu0
      %v516 = vadd.f32 0.0, %v515
      %v517 = vpop.f32.mrb[0].mxu0
      %v518 = vpop.f32.mrb[0].mxu0
      %v519 = vadd.f32 0.0, %v518
      %v520 = vpop.f32.mrb[0].mxu0
      %521 = vdwg.mxu0
      %v522 = vsel %vm276, %v516, -inf
      %523 = vmax.xlane.f32.xlu0 %v522
      %v524 = vpop.xlane.xlu0 %523
      %v525 = vsel %vm276, %v519, -inf
      %526 = vmax.xlane.f32.xlu0 %v525
      %v527 = vpop.xlane.xlu0 %526
      %v528 = vsub.f32 %v516, %v524
      %v529 = vsub.f32 %v519, %v527
      %v530 = vmul.f32 %v528, 1.442695
      %v531 = vpow.pop %v530
      %v532 = vmul.f32 %v529, 1.442695
      %v533 = vpow.pop %v532
      %v534 = vsel %vm276, %v531, 0.0
      %535 = vadd.xlane.f32.xlu0 %v534
      %v536 = vpop.xlane.xlu0 %535
      %v537 = vsel %vm276, %v533, 0.0
      %538 = vadd.xlane.f32.xlu0 %v537
      %v539 = vpop.xlane.xlu0 %538
      %v540 = vrcp.pop %v536
      %v541 = vrcp.pop %v539
      %v542 = vmul.f32 %v531, %v540
      %v543 = vmul.f32 %v533, %v541
      %v544 = vpack.c.bf16 %v543, %v542
      %545 = vrot.lane.b32.xlu0 %v304, 112
      %v546 = vpop.permute.xlu0 %545
      %v549 = vsel %vm276, %v544, 0
      %551 = vmatprep.subr.bf16.mxu0 0
      %552 = vmatpush1.bf16.msra.mxu0 %v546
      %553 = vmatprep.subr.bf16.mxu0 0
      %554 = vmatpush1.bf16.msra.mxu0 0
      %555 = vmatprep.subr.bf16.mxu0 0
      %556 = vmatpush1.bf16.msra.mxu0 0
      %557 = vmatprep.subr.bf16.mxu0 0
      %558 = vmatpush1.bf16.msra.mxu0 0
      %559 = vmatprep.subr.bf16.mxu0 0
      %560 = vmatpush1.bf16.msra.mxu0 0
      %561 = vmatprep.subr.bf16.mxu0 0
      %562 = vmatpush1.bf16.msra.mxu0 0
      %563 = vmatprep.subr.bf16.mxu0 0
      %564 = vmatpush1.bf16.msra.mxu0 0
      %565 = vmatprep.subr.bf16.mxu0 0
      %566 = vmatpush1.bf16.msra.mxu0 0
      %567 = vmatprep.subr.bf16.mxu0 0
      %568 = vmatpush1.bf16.msra.mxu0 0
      %569 = vmatprep.subr.bf16.mxu0 0
      %570 = vmatpush1.bf16.msra.mxu0 0
      %571 = vmatprep.subr.bf16.mxu0 0
      %572 = vmatpush1.bf16.msra.mxu0 0
      %573 = vmatprep.subr.bf16.mxu0 0
      %574 = vmatpush1.bf16.msra.mxu0 0
      %575 = vmatprep.subr.bf16.mxu0 0
      %576 = vmatpush1.bf16.msra.mxu0 0
      %577 = vmatprep.subr.bf16.mxu0 0
      %578 = vmatpush1.bf16.msra.mxu0 0
      %579 = vmatprep.subr.bf16.mxu0 0
      %580 = vmatpush1.bf16.msra.mxu0 0
      %581 = vmatprep.subr.bf16.mxu0 0
      %582 = vmatpush1.bf16.msra.mxu0 0
      %583 = vmatprep.mubr.bf16.mxu0 0
      %584 = vmatmul.mubr.bf16.gmra.mrb[0].mxu0 %v549
      %v585 = vpop.f32.mrb[0].mxu0
      %v586 = vadd.f32 0.0, %v585
      %v587 = vpop.f32.mrb[0].mxu0
      %v588 = vpop.f32.mrb[0].mxu0
      %v589 = vadd.f32 0.0, %v588
      %v590 = vpop.f32.mrb[0].mxu0
      %591 = vdwg.mxu0
      %592 = vrot.lane.b32.xlu0 %v222, 104
      %v593 = vpop.permute.xlu0 %592
      %594 = vrot.lane.b32.xlu0 %v227, 104
      %v595 = vpop.permute.xlu0 %594
      %v597 = vsel %vm228, %v593, 0
      %v600 = vsel %vm228, %v595, 0
      %602 = vmatprep.subr.bf16.mxu0 0
      %603 = vmatpush1.bf16.xpose.msra.mxu0 %v600
      %604 = vmatprep.subr.bf16.mxu0 0
      %605 = vmatpush1.bf16.xpose.msra.mxu0 0
      %606 = vmatprep.subr.bf16.mxu0 0
      %607 = vmatpush1.bf16.xpose.msra.mxu0 0
      %608 = vmatprep.subr.bf16.mxu0 0
      %609 = vmatpush1.bf16.xpose.msra.mxu0 0
      %610 = vmatprep.subr.bf16.mxu0 0
      %611 = vmatpush1.bf16.xpose.msra.mxu0 0
      %612 = vmatprep.subr.bf16.mxu0 0
      %613 = vmatpush1.bf16.xpose.msra.mxu0 0
      %614 = vmatprep.subr.bf16.mxu0 0
      %615 = vmatpush1.bf16.xpose.msra.mxu0 0
      %616 = vmatprep.subr.bf16.mxu0 0
      %617 = vmatpush1.bf16.xpose.msra.mxu0 0
      %618 = vmatprep.subr.bf16.mxu0 0
      %619 = vmatpush1.bf16.xpose.msra.mxu0 0
      %620 = vmatprep.subr.bf16.mxu0 0
      %621 = vmatpush1.bf16.xpose.msra.mxu0 0
      %622 = vmatprep.subr.bf16.mxu0 0
      %623 = vmatpush1.bf16.xpose.msra.mxu0 0
      %624 = vmatprep.subr.bf16.mxu0 0
      %625 = vmatpush1.bf16.xpose.msra.mxu0 0
      %626 = vmatprep.subr.bf16.mxu0 0
      %627 = vmatpush1.bf16.xpose.msra.mxu0 0
      %628 = vmatprep.subr.bf16.mxu0 0
      %629 = vmatpush1.bf16.xpose.msra.mxu0 0
      %630 = vmatprep.subr.bf16.mxu0 0
      %631 = vmatpush1.bf16.xpose.msra.mxu0 0
      %632 = vmatprep.subr.bf16.mxu0 0
      %633 = vmatpush1.bf16.xpose.msra.mxu0 0
      %634 = vmatprep.mubr.bf16.mxu0 0
      %635 = vmatmul.mubr.bf16.gmra.mrb[0].mxu0 %v597
      %v636 = vpop.f32.mrb[0].mxu0
      %v637 = vadd.f32 0.0, %v636
      %v638 = vpop.f32.mrb[0].mxu0
      %v639 = vpop.f32.mrb[0].mxu0
      %v640 = vadd.f32 0.0, %v639
      %v641 = vpop.f32.mrb[0].mxu0
      %642 = vdwg.mxu0
      %v643 = vsel %vm276, %v637, -inf
      %644 = vmax.xlane.f32.xlu0 %v643
      %v645 = vpop.xlane.xlu0 %644
      %v646 = vsel %vm276, %v640, -inf
      %647 = vmax.xlane.f32.xlu0 %v646
      %v648 = vpop.xlane.xlu0 %647
      %v649 = vsub.f32 %v637, %v645
      %v650 = vsub.f32 %v640, %v648
      %v651 = vmul.f32 %v649, 1.442695
      %v652 = vpow.pop %v651
      %v653 = vmul.f32 %v650, 1.442695
      %v654 = vpow.pop %v653
      %v655 = vsel %vm276, %v652, 0.0
      %656 = vadd.xlane.f32.xlu0 %v655
      %v657 = vpop.xlane.xlu0 %656
      %v658 = vsel %vm276, %v654, 0.0
      %659 = vadd.xlane.f32.xlu0 %v658
      %v660 = vpop.xlane.xlu0 %659
      %v661 = vrcp.pop %v657
      %v662 = vrcp.pop %v660
      %v663 = vmul.f32 %v652, %v661
      %v664 = vmul.f32 %v654, %v662
      %v665 = vpack.c.bf16 %v664, %v663
      %666 = vrot.lane.b32.xlu0 %v304, 104
      %v667 = vpop.permute.xlu0 %666
      %v670 = vsel %vm276, %v665, 0
      %672 = vmatprep.subr.bf16.mxu0 0
      %673 = vmatpush1.bf16.msra.mxu0 %v667
      %674 = vmatprep.subr.bf16.mxu0 0
      %675 = vmatpush1.bf16.msra.mxu0 0
      %676 = vmatprep.subr.bf16.mxu0 0
      %677 = vmatpush1.bf16.msra.mxu0 0
      %678 = vmatprep.subr.bf16.mxu0 0
      %679 = vmatpush1.bf16.msra.mxu0 0
      %680 = vmatprep.subr.bf16.mxu0 0
      %681 = vmatpush1.bf16.msra.mxu0 0
      %682 = vmatprep.subr.bf16.mxu0 0
      %683 = vmatpush1.bf16.msra.mxu0 0
      %684 = vmatprep.subr.bf16.mxu0 0
      %685 = vmatpush1.bf16.msra.mxu0 0
      %686 = vmatprep.subr.bf16.mxu0 0
      %687 = vmatpush1.bf16.msra.mxu0 0
      %688 = vmatprep.subr.bf16.mxu0 0
      %689 = vmatpush1.bf16.msra.mxu0 0
      %690 = vmatprep.subr.bf16.mxu0 0
      %691 = vmatpush1.bf16.msra.mxu0 0
      %692 = vmatprep.subr.bf16.mxu0 0
      %693 = vmatpush1.bf16.msra.mxu0 0
      %694 = vmatprep.subr.bf16.mxu0 0
      %695 = vmatpush1.bf16.msra.mxu0 0
      %696 = vmatprep.subr.bf16.mxu0 0
      %697 = vmatpush1.bf16.msra.mxu0 0
      %698 = vmatprep.subr.bf16.mxu0 0
      %699 = vmatpush1.bf16.msra.mxu0 0
      %700 = vmatprep.subr.bf16.mxu0 0
      %701 = vmatpush1.bf16.msra.mxu0 0
      %702 = vmatprep.subr.bf16.mxu0 0
      %703 = vmatpush1.bf16.msra.mxu0 0
      %704 = vmatprep.mubr.bf16.mxu0 0
      %705 = vmatmul.mubr.bf16.gmra.mrb[0].mxu0 %v670
      %v706 = vpop.f32.mrb[0].mxu0
      %v707 = vadd.f32 0.0, %v706
      %v708 = vpop.f32.mrb[0].mxu0
      %v709 = vpop.f32.mrb[0].mxu0
      %v710 = vadd.f32 0.0, %v709
      %v711 = vpop.f32.mrb[0].mxu0
      %712 = vdwg.mxu0
      %715 = vrot.lane.b32.xlu0 %v465, 8
      %v716 = vpop.permute.xlu0 %715
      %717 = vrot.lane.b32.xlu0 %v468, 8
      %v718 = vpop.permute.xlu0 %717
      %723 = vrot.lane.b32.xlu0 %v586, 16
      %v724 = vpop.permute.xlu0 %723
      %725 = vrot.lane.b32.xlu0 %v589, 16
      %v726 = vpop.permute.xlu0 %725
      %731 = vrot.lane.b32.xlu0 %v707, 24
      %v732 = vpop.permute.xlu0 %731
      %733 = vrot.lane.b32.xlu0 %v710, 24
      %v734 = vpop.permute.xlu0 %733
      %v737 = vsel %vm228, %v344, %v716
      %v738 = vsel %vm228, %v347, %v718
      %v739 = vsel %vm276, %v737, %v724
      %v740 = vsel %vm276, %v738, %v726
      %vm741 = vcmask 195584
      %v742 = vsel %vm741, %v739, %v732
      %v743 = vsel %vm741, %v740, %v734
      %v744 = vpack.c.bf16 %v743, %v742
      %v746 = vunpack.c.l.b16 %v744
      %v747 = vunpack.c.h.b16 %v744
      %v748 = vpack.c.b16 %v746, %v746
      %v749 = vpack.c.b16 %v747, %v747
      %vm752 = vcmask 257024
      %753 = vst.msk [vmem:[%s210] sm:$0xf] %vm752, %v748
      %754 = vst.msk [vmem:[%s210 + $0x4] sm:$0xf] %vm752, %v749
      %p755 = scmp.lt.s32.totalorder %s14, 1
      %s756 = scalar_select %p755, %s14, 1
      %s757 = smul.addr %s756, 2
      %s758 = smul.addr %s757, 4
      %s759 = scalar_lea.vmem %s3, %s758
      // Predicated region
      $region33: #{encoder_bottom_up_forward.16} parent=31 // pred_check
        %p760 = pneg %p110
      $region34: #{encoder_bottom_up_forward.16} parent=31 // pred_check_branch
        %762 = sbr.rel (%p760) target = $region36
      $region35: #{encoder_bottom_up_forward.16} parent=31 // pred_region
        _
      $region36: #{encoder_bottom_up_forward.16} parent=31 // pred_fallthru
        _
    $region32: #{encoder_bottom_up_forward.16} parent=5 // pred_fallthru
      _
    %p763 = scmp.le.s32.totalorder 2, %s9
    // Predicated region
    $region37: #{encoder_bottom_up_forward.16} parent=5 // pred_check
      %p764 = pneg %p763
    $region38: #{encoder_bottom_up_forward.16} parent=5 // pred_check_branch
      %766 = sbr.rel (%p764) target = $region40
    $region39: #{encoder_bottom_up_forward.16} parent=5 // pred_region
      %s767 = ssub.s32 %s9, 2
      // Predicated region
      $region41: #{encoder_bottom_up_forward.16} parent=39 // pred_check
        %p768 = pneg %p116
      $region42: #{encoder_bottom_up_forward.16} parent=39 // pred_check_branch
        %770 = sbr.rel (%p768) target = $region44
      $region43: #{encoder_bottom_up_forward.16} parent=39 // pred_region
        %p771 = scmp.lt.s32.totalorder %s15, 1
        %s772 = scalar_select %p771, %s15, 1
        %s773 = smul.addr %s772, 2
        %s774 = smul.addr %s773, 4
        %s775 = scalar_lea.vmem %s3, %s774
      $region44: #{encoder_bottom_up_forward.16} parent=39 // pred_fallthru
        _
    $region40: #{encoder_bottom_up_forward.16} parent=5 // pred_fallthru
      _
  $region6: #{encoder_bottom_up_forward.16} parent=0 // loop_footer
    %s13 = sadd.s32 1, %s9
  $region7: #{encoder_bottom_up_forward.16} parent=0 // loop_footer_branch
    %8 = sbr.rel target = $region3
  $region8: #{encoder_bottom_up_forward.16} parent=0 // loop_exit
    _

// kernel: encoder_bottom_up_forward.17
$region0: #{encoder_bottom_up_forward.17}
  #allocation0 [shape = 'u32[]', space=smem, size = 0x4, offset = 0x4, fixed_abs, tag = 'smem constant byte address 0x4 - core index']
  #allocation1 [shape = 'u32[144,128]{1,0:T(1,128)}', space=vmem, size = 0x12000, scoped, tag = 'internal scratch']
  #allocation2 [shape = 'f32[32,32]{1,0:T(8,128)}', space=vmem, size = 0x4000, scoped, tag = 'scratch operand']
  %s0 = inlined_call_operand.vmem [shape: bf16[32,32], index: 0, kind: input, shape index: {}]
  %s1 = inlined_call_operand.vmem [shape: bf16[32,32], index: 1, kind: input, shape index: {}]
  %s2 = inlined_call_operand.vmem [shape: f32[1,32], index: 2, kind: input, shape index: {}]
  %s3 = inlined_call_operand.vmem [shape: f32[32,32], index: 3, kind: input, shape index: {}]
  %s4 = inlined_call_operand.vmem [shape: f32[32,32], index: 4, kind: output, shape index: {}]
  %s5 = sld [smem:[#allocation0]]
  $region34: #{encoder_bottom_up_forward.17} parent=0
    _
  %s7 = ssub.s32 1, %s5
  %s8 = scalar_select 0, %s7, %s5
  // Predicated region
  $region2: #{encoder_bottom_up_forward.17} parent=0 // pred_check
    _
  $region3: #{encoder_bottom_up_forward.17} parent=0 // pred_check_branch
    %10 = sbr.rel (0) target = $region5
  $region4: #{encoder_bottom_up_forward.17} parent=0 // pred_region
    _
  $region5: #{encoder_bottom_up_forward.17} parent=0 // pred_fallthru
    _
  // Predicated region
  $region6: #{encoder_bottom_up_forward.17} parent=0 // pred_check
    _
  $region7: #{encoder_bottom_up_forward.17} parent=0 // pred_check_branch
    %12 = sbr.rel (0) target = $region9
  $region8: #{encoder_bottom_up_forward.17} parent=0 // pred_region
    _
  $region9: #{encoder_bottom_up_forward.17} parent=0 // pred_fallthru
    _
  // Predicated region
  $region10: #{encoder_bottom_up_forward.17} parent=0 // pred_check
    _
  $region11: #{encoder_bottom_up_forward.17} parent=0 // pred_check_branch
    %14 = sbr.rel (0) target = $region13
  $region12: #{encoder_bottom_up_forward.17} parent=0 // pred_region
    _
  $region13: #{encoder_bottom_up_forward.17} parent=0 // pred_fallthru
    _
  // Predicated region
  $region14: #{encoder_bottom_up_forward.17} parent=0 // pred_check
    _
  $region15: #{encoder_bottom_up_forward.17} parent=0 // pred_check_branch
    %16 = sbr.rel (0) target = $region17
  $region16: #{encoder_bottom_up_forward.17} parent=0 // pred_region
    _
  $region17: #{encoder_bottom_up_forward.17} parent=0 // pred_fallthru
    _
  %p18 = scmp.eq.s32.totalorder 0, 0
  // Predicated region
  $region18: #{encoder_bottom_up_forward.17} parent=0 // pred_check
    %p19 = pneg %p18
  $region19: #{encoder_bottom_up_forward.17} parent=0 // pred_check_branch
    %21 = sbr.rel (%p19) target = $region21
  $region20: #{encoder_bottom_up_forward.17} parent=0 // pred_region
    %vm22 = vcmask 261120
    %23 = vst.msk [vmem:[#allocation2] sm:$0xff] %vm22, 0.0
    %24 = vst.msk [vmem:[#allocation2 + $0x8] sm:$0xff] %vm22, 0.0
    %25 = vst.msk [vmem:[#allocation2 + $0x10] sm:$0xff] %vm22, 0.0
    %26 = vst.msk [vmem:[#allocation2 + $0x18] sm:$0xff] %vm22, 0.0
  $region21: #{encoder_bottom_up_forward.17} parent=0 // pred_fallthru
    _
  %v27 = vld [vmem:[#allocation2] sm:$0xff]
  %v28 = vld [vmem:[#allocation2 + $0x8] sm:$0xff]
  %v29 = vld [vmem:[#allocation2 + $0x10] sm:$0xff]
  %v30 = vld [vmem:[#allocation2 + $0x18] sm:$0xff]
  %v31 = vld [vmem:[%s0] sm:$0xf]
  %v32 = vld [vmem:[%s0 + $0x4] sm:$0xf]
  %v33 = vld [vmem:[%s0 + $0x8] sm:$0xf]
  %v34 = vld [vmem:[%s0 + $0xc] sm:$0xf]
  %v35 = vld [vmem:[%s1] sm:$0xf]
  %v36 = vld [vmem:[%s1 + $0x4] sm:$0xf]
  %v37 = vld [vmem:[%s1 + $0x8] sm:$0xf]
  %v38 = vld [vmem:[%s1 + $0xc] sm:$0xf]
  %v43 = vunpack.c.l.b16 %v31
  %v44 = vunpack.c.l.b16 %v32
  %v45 = vunpack.c.l.b16 %v33
  %v46 = vunpack.c.l.b16 %v34
  %v47 = vpack.c.b16 %v44, %v43
  %v48 = vpack.c.b16 %v46, %v45
  %v53 = vunpack.c.l.b16 %v35
  %v54 = vunpack.c.l.b16 %v36
  %v55 = vunpack.c.l.b16 %v37
  %v56 = vunpack.c.l.b16 %v38
  %v57 = vpack.c.b16 %v54, %v53
  %v58 = vpack.c.b16 %v56, %v55
  %vm61 = vcmask 261120
  %v63 = vsel %vm61, %v47, 0
  %v66 = vsel %vm61, %v48, 0
  %68 = vmatprep.subr.bf16.mxu0 0
  %69 = vmatpush1.bf16.msra.mxu0 %v57
  %70 = vmatprep.subr.bf16.mxu0 0
  %71 = vmatpush1.bf16.msra.mxu0 %v58
  %72 = vmatprep.subr.bf16.mxu0 0
  %73 = vmatpush1.bf16.msra.mxu0 0
  %74 = vmatprep.subr.bf16.mxu0 0
  %75 = vmatpush1.bf16.msra.mxu0 0
  %76 = vmatprep.subr.bf16.mxu0 0
  %77 = vmatpush1.bf16.msra.mxu0 0
  %78 = vmatprep.subr.bf16.mxu0 0
  %79 = vmatpush1.bf16.msra.mxu0 0
  %80 = vmatprep.subr.bf16.mxu0 0
  %81 = vmatpush1.bf16.msra.mxu0 0
  %82 = vmatprep.subr.bf16.mxu0 0
  %83 = vmatpush1.bf16.msra.mxu0 0
  %84 = vmatprep.subr.bf16.mxu0 0
  %85 = vmatpush1.bf16.msra.mxu0 0
  %86 = vmatprep.subr.bf16.mxu0 0
  %87 = vmatpush1.bf16.msra.mxu0 0
  %88 = vmatprep.subr.bf16.mxu0 0
  %89 = vmatpush1.bf16.msra.mxu0 0
  %90 = vmatprep.subr.bf16.mxu0 0
  %91 = vmatpush1.bf16.msra.mxu0 0
  %92 = vmatprep.subr.bf16.mxu0 0
  %93 = vmatpush1.bf16.msra.mxu0 0
  %94 = vmatprep.subr.bf16.mxu0 0
  %95 = vmatpush1.bf16.msra.mxu0 0
  %96 = vmatprep.subr.bf16.mxu0 0
  %97 = vmatpush1.bf16.msra.mxu0 0
  %98 = vmatprep.subr.bf16.mxu0 0
  %99 = vmatpush1.bf16.msra.mxu0 0
  %100 = vmatprep.mubr.bf16.mxu0 0
  %101 = vmatmul.mubr.bf16.gmra.mrb[0].mxu0 %v63
  %v102 = vpop.f32.mrb[0].mxu0
  %v103 = vadd.f32 0.0, %v102
  %v104 = vpop.f32.mrb[0].mxu0
  %v105 = vpop.f32.mrb[0].mxu0
  %v106 = vadd.f32 0.0, %v105
  %v107 = vpop.f32.mrb[0].mxu0
  %108 = vmatprep.mubr.bf16.mxu0 0
  %109 = vmatmul.mubr.bf16.gmra.mrb[0].mxu0 %v66
  %v110 = vpop.f32.mrb[0].mxu0
  %v111 = vadd.f32 0.0, %v110
  %v112 = vpop.f32.mrb[0].mxu0
  %v113 = vpop.f32.mrb[0].mxu0
  %v114 = vadd.f32 0.0, %v113
  %v115 = vpop.f32.mrb[0].mxu0
  %116 = vdwg.mxu0
  %v117 = vadd.f32 %v27, %v103
  %v118 = vadd.f32 %v28, %v106
  %v119 = vadd.f32 %v29, %v111
  %v120 = vadd.f32 %v30, %v114
  %121 = vst.msk [vmem:[#allocation2] sm:$0xff] %vm61, %v117
  %122 = vst.msk [vmem:[#allocation2 + $0x8] sm:$0xff] %vm61, %v118
  %123 = vst.msk [vmem:[#allocation2 + $0x10] sm:$0xff] %vm61, %v119
  %124 = vst.msk [vmem:[#allocation2 + $0x18] sm:$0xff] %vm61, %v120
  // Predicated region
  $region22: #{encoder_bottom_up_forward.17} parent=0 // pred_check
    %p125 = pneg %p18
  $region23: #{encoder_bottom_up_forward.17} parent=0 // pred_check_branch
    %127 = sbr.rel (%p125) target = $region25
  $region24: #{encoder_bottom_up_forward.17} parent=0 // pred_region
    %v128 = vld [vmem:[#allocation2] sm:$0xff]
    %v129 = vld [vmem:[#allocation2 + $0x8] sm:$0xff]
    %v130 = vld [vmem:[#allocation2 + $0x10] sm:$0xff]
    %v131 = vld [vmem:[#allocation2 + $0x18] sm:$0xff]
    %v132 = vld [vmem:[%s2] sm:$0x1]
    %v134 = vlaneseq
    %v135 = vshrl.u32 %v134, 7
    %v136 = vsub.s32 0, %v135
    %v137 = vrot.slane %v132, %v136
    %v139 = vadd.f32 %v128, %v137
    %v140 = vadd.f32 %v129, %v137
    %v141 = vadd.f32 %v130, %v137
    %v142 = vadd.f32 %v131, %v137
    %v143 = vld [vmem:[%s3] sm:$0xff]
    %v144 = vld [vmem:[%s3 + $0x8] sm:$0xff]
    %v145 = vld [vmem:[%s3 + $0x10] sm:$0xff]
    %v146 = vld [vmem:[%s3 + $0x18] sm:$0xff]
    %v147 = vadd.f32 %v139, %v143
    %v148 = vadd.f32 %v140, %v144
    %v149 = vadd.f32 %v141, %v145
    %v150 = vadd.f32 %v142, %v146
    %151 = vst.msk [vmem:[%s4] sm:$0xff] %vm61, %v147
    %152 = vst.msk [vmem:[%s4 + $0x8] sm:$0xff] %vm61, %v148
    %153 = vst.msk [vmem:[%s4 + $0x10] sm:$0xff] %vm61, %v149
    %154 = vst.msk [vmem:[%s4 + $0x18] sm:$0xff] %vm61, %v150
  $region25: #{encoder_bottom_up_forward.17} parent=0 // pred_fallthru
    _
  // Predicated region
  $region26: #{encoder_bottom_up_forward.17} parent=0 // pred_check
    _
  $region27: #{encoder_bottom_up_forward.17} parent=0 // pred_check_branch
    %156 = sbr.rel (0) target = $region29
  $region28: #{encoder_bottom_up_forward.17} parent=0 // pred_region
    _
  $region29: #{encoder_bottom_up_forward.17} parent=0 // pred_fallthru
    _
  // Predicated region
  $region30: #{encoder_bottom_up_forward.17} parent=0 // pred_check
    _
  $region31: #{encoder_bottom_up_forward.17} parent=0 // pred_check_branch
    %158 = sbr.rel (0) target = $region33
  $region32: #{encoder_bottom_up_forward.17} parent=0 // pred_region
    _
  $region33: #{encoder_bottom_up_forward.17} parent=0 // pred_fallthru
    _

// kernel: encoder_bottom_up_forward.18
$region0: #{encoder_bottom_up_forward.18}
  #allocation0 [shape = 'u32[]', space=smem, size = 0x4, offset = 0x4, fixed_abs, tag = 'smem constant byte address 0x4 - core index']
  #allocation1 [shape = 'u32[144,128]{1,0:T(1,128)}', space=vmem, size = 0x12000, scoped, tag = 'internal scratch']
  %s0 = inlined_call_operand.vmem [shape: f32[32,32], index: 0, kind: input, shape index: {}]
  %s1 = inlined_call_operand.vmem [shape: f32[1,32], index: 1, kind: input, shape index: {}]
  %s2 = inlined_call_operand.vmem [shape: f32[1,32], index: 2, kind: input, shape index: {}]
  %s3 = inlined_call_operand.vmem [shape: bf16[32,64], index: 3, kind: input, shape index: {}]
  %s4 = inlined_call_operand.vmem [shape: f32[1,64], index: 4, kind: input, shape index: {}]
  %s5 = inlined_call_operand.vmem [shape: bf16[32,64], index: 5, kind: output, shape index: {}]
  %s6 = sld [smem:[#allocation0]]
  $region30: #{encoder_bottom_up_forward.18} parent=0
    _
  %s8 = ssub.s32 1, %s6
  %s9 = scalar_select 0, %s8, %s6
  // Predicated region
  $region2: #{encoder_bottom_up_forward.18} parent=0 // pred_check
    _
  $region3: #{encoder_bottom_up_forward.18} parent=0 // pred_check_branch
    %11 = sbr.rel (0) target = $region5
  $region4: #{encoder_bottom_up_forward.18} parent=0 // pred_region
    _
  $region5: #{encoder_bottom_up_forward.18} parent=0 // pred_fallthru
    _
  // Predicated region
  $region6: #{encoder_bottom_up_forward.18} parent=0 // pred_check
    _
  $region7: #{encoder_bottom_up_forward.18} parent=0 // pred_check_branch
    %13 = sbr.rel (0) target = $region9
  $region8: #{encoder_bottom_up_forward.18} parent=0 // pred_region
    _
  $region9: #{encoder_bottom_up_forward.18} parent=0 // pred_fallthru
    _
  // Predicated region
  $region10: #{encoder_bottom_up_forward.18} parent=0 // pred_check
    _
  $region11: #{encoder_bottom_up_forward.18} parent=0 // pred_check_branch
    %15 = sbr.rel (0) target = $region13
  $region12: #{encoder_bottom_up_forward.18} parent=0 // pred_region
    _
  $region13: #{encoder_bottom_up_forward.18} parent=0 // pred_fallthru
    _
  // Predicated region
  $region14: #{encoder_bottom_up_forward.18} parent=0 // pred_check
    _
  $region15: #{encoder_bottom_up_forward.18} parent=0 // pred_check_branch
    %17 = sbr.rel (0) target = $region17
  $region16: #{encoder_bottom_up_forward.18} parent=0 // pred_region
    _
  $region17: #{encoder_bottom_up_forward.18} parent=0 // pred_fallthru
    _
  // Predicated region
  $region18: #{encoder_bottom_up_forward.18} parent=0 // pred_check
    _
  $region19: #{encoder_bottom_up_forward.18} parent=0 // pred_check_branch
    %19 = sbr.rel (0) target = $region21
  $region20: #{encoder_bottom_up_forward.18} parent=0 // pred_region
    _
  $region21: #{encoder_bottom_up_forward.18} parent=0 // pred_fallthru
    _
  %v21 = vld [vmem:[%s0] sm:$0xff]
  %v22 = vld [vmem:[%s0 + $0x8] sm:$0xff]
  %v23 = vld [vmem:[%s0 + $0x10] sm:$0xff]
  %v24 = vld [vmem:[%s0 + $0x18] sm:$0xff]
  %vm25 = vcmask 261120
  %v26 = vsel %vm25, %v21, 0.0
  %27 = vadd.xlane.f32.xlu0 %v26
  %v28 = vpop.xlane.xlu0 %27
  %v29 = vsel %vm25, %v22, 0.0
  %30 = vadd.xlane.f32.xlu0 %v29
  %v31 = vpop.xlane.xlu0 %30
  %v32 = vsel %vm25, %v23, 0.0
  %33 = vadd.xlane.f32.xlu0 %v32
  %v34 = vpop.xlane.xlu0 %33
  %v35 = vsel %vm25, %v24, 0.0
  %36 = vadd.xlane.f32.xlu0 %v35
  %v37 = vpop.xlane.xlu0 %36
  %v38 = vrcp.pop 32.0
  %v39 = vmul.f32 %v28, %v38
  %v40 = vmul.f32 %v31, %v38
  %v41 = vmul.f32 %v34, %v38
  %v42 = vmul.f32 %v37, %v38
  %v43 = vsub.f32 %v21, %v39
  %v44 = vsub.f32 %v22, %v40
  %v45 = vsub.f32 %v23, %v41
  %v46 = vsub.f32 %v24, %v42
  %v47 = vmul.f32 %v43, %v43
  %v48 = vmul.f32 %v44, %v44
  %v49 = vmul.f32 %v45, %v45
  %v50 = vmul.f32 %v46, %v46
  %v51 = vsel %vm25, %v47, 0.0
  %52 = vadd.xlane.f32.xlu0 %v51
  %v53 = vpop.xlane.xlu0 %52
  %v54 = vsel %vm25, %v48, 0.0
  %55 = vadd.xlane.f32.xlu0 %v54
  %v56 = vpop.xlane.xlu0 %55
  %v57 = vsel %vm25, %v49, 0.0
  %58 = vadd.xlane.f32.xlu0 %v57
  %v59 = vpop.xlane.xlu0 %58
  %v60 = vsel %vm25, %v50, 0.0
  %61 = vadd.xlane.f32.xlu0 %v60
  %v62 = vpop.xlane.xlu0 %61
  %v63 = vmul.f32 %v53, 0.032258064
  %v64 = vmul.f32 %v56, 0.032258064
  %v65 = vmul.f32 %v59, 0.032258064
  %v66 = vmul.f32 %v62, 0.032258064
  %v67 = vrsqrt.pop %v63
  %v68 = vmul.f32 %v63, %v67
  %vm69 = vcmp.eq.f32.partialorder %v63, inf
  %v70 = vsel %vm69, %v63, %v68
  %vm71 = vcmp.eq.f32.partialorder %v63, 0.0
  %v72 = vand.u32 %v63, 2147483648
  %v73 = vsel %vm71, %v72, %v70
  %v74 = vrsqrt.pop %v64
  %v75 = vmul.f32 %v64, %v74
  %vm76 = vcmp.eq.f32.partialorder %v64, inf
  %v77 = vsel %vm76, %v64, %v75
  %vm78 = vcmp.eq.f32.partialorder %v64, 0.0
  %v79 = vand.u32 %v64, 2147483648
  %v80 = vsel %vm78, %v79, %v77
  %v81 = vrsqrt.pop %v65
  %v82 = vmul.f32 %v65, %v81
  %vm83 = vcmp.eq.f32.partialorder %v65, inf
  %v84 = vsel %vm83, %v65, %v82
  %vm85 = vcmp.eq.f32.partialorder %v65, 0.0
  %v86 = vand.u32 %v65, 2147483648
  %v87 = vsel %vm85, %v86, %v84
  %v88 = vrsqrt.pop %v66
  %v89 = vmul.f32 %v66, %v88
  %vm90 = vcmp.eq.f32.partialorder %v66, inf
  %v91 = vsel %vm90, %v66, %v89
  %vm92 = vcmp.eq.f32.partialorder %v66, 0.0
  %v93 = vand.u32 %v66, 2147483648
  %v94 = vsel %vm92, %v93, %v91
  %v95 = vadd.f32 %v73, 1e-06
  %v96 = vadd.f32 %v80, 1e-06
  %v97 = vadd.f32 %v87, 1e-06
  %v98 = vadd.f32 %v94, 1e-06
  %v99 = vrcp.pop %v95
  %v100 = vrcp.pop %v96
  %v101 = vrcp.pop %v97
  %v102 = vrcp.pop %v98
  %v103 = vld [vmem:[%s1] sm:$0x1]
  %v105 = vlaneseq
  %v106 = vshrl.u32 %v105, 7
  %v107 = vsub.s32 0, %v106
  %v108 = vrot.slane %v103, %v107
  %v110 = vmul.f32 %v108, %v43
  %v111 = vmul.f32 %v108, %v44
  %v112 = vmul.f32 %v108, %v45
  %v113 = vmul.f32 %v108, %v46
  %v114 = vmul.f32 %v110, %v99
  %v115 = vmul.f32 %v111, %v100
  %v116 = vmul.f32 %v112, %v101
  %v117 = vmul.f32 %v113, %v102
  %v118 = vld [vmem:[%s2] sm:$0x1]
  %v120 = vlaneseq
  %v121 = vshrl.u32 %v120, 7
  %v122 = vsub.s32 0, %v121
  %v123 = vrot.slane %v118, %v122
  %v125 = vadd.f32 %v114, %v123
  %v126 = vadd.f32 %v115, %v123
  %v127 = vadd.f32 %v116, %v123
  %v128 = vadd.f32 %v117, %v123
  %v129 = vpack.c.bf16 %v126, %v125
  %v130 = vpack.c.bf16 %v128, %v127
  %v131 = vld [vmem:[%s3] sm:$0xf]
  %v132 = vld [vmem:[%s3 + $0x4] sm:$0xf]
  %v133 = vld [vmem:[%s3 + $0x8] sm:$0xf]
  %v134 = vld [vmem:[%s3 + $0xc] sm:$0xf]
  %v135 = vld [vmem:[%s4] sm:$0x1]
  %v137 = vlaneseq
  %v138 = vshrl.u32 %v137, 7
  %v139 = vsub.s32 0, %v138
  %v140 = vrot.slane %v135, %v139
  %v146 = vunpack.c.l.b16 %v131
  %v147 = vunpack.c.l.b16 %v132
  %v148 = vunpack.c.l.b16 %v133
  %v149 = vunpack.c.l.b16 %v134
  %v150 = vpack.c.b16 %v147, %v146
  %v151 = vpack.c.b16 %v149, %v148
  %v155 = vsel %vm25, %v129, 0
  %v158 = vsel %vm25, %v130, 0
  %160 = vmatprep.subr.bf16.mxu0 0
  %161 = vmatpush1.bf16.msra.mxu0 %v150
  %162 = vmatprep.subr.bf16.mxu0 0
  %163 = vmatpush1.bf16.msra.mxu0 %v151
  %164 = vmatprep.subr.bf16.mxu0 0
  %165 = vmatpush1.bf16.msra.mxu0 0
  %166 = vmatprep.subr.bf16.mxu0 0
  %167 = vmatpush1.bf16.msra.mxu0 0
  %168 = vmatprep.subr.bf16.mxu0 0
  %169 = vmatpush1.bf16.msra.mxu0 0
  %170 = vmatprep.subr.bf16.mxu0 0
  %171 = vmatpush1.bf16.msra.mxu0 0
  %172 = vmatprep.subr.bf16.mxu0 0
  %173 = vmatpush1.bf16.msra.mxu0 0
  %174 = vmatprep.subr.bf16.mxu0 0
  %175 = vmatpush1.bf16.msra.mxu0 0
  %176 = vmatprep.subr.bf16.mxu0 0
  %177 = vmatpush1.bf16.msra.mxu0 0
  %178 = vmatprep.subr.bf16.mxu0 0
  %179 = vmatpush1.bf16.msra.mxu0 0
  %180 = vmatprep.subr.bf16.mxu0 0
  %181 = vmatpush1.bf16.msra.mxu0 0
  %182 = vmatprep.subr.bf16.mxu0 0
  %183 = vmatpush1.bf16.msra.mxu0 0
  %184 = vmatprep.subr.bf16.mxu0 0
  %185 = vmatpush1.bf16.msra.mxu0 0
  %186 = vmatprep.subr.bf16.mxu0 0
  %187 = vmatpush1.bf16.msra.mxu0 0
  %188 = vmatprep.subr.bf16.mxu0 0
  %189 = vmatpush1.bf16.msra.mxu0 0
  %190 = vmatprep.subr.bf16.mxu0 0
  %191 = vmatpush1.bf16.msra.mxu0 0
  %192 = vmatprep.mubr.bf16.mxu0 0
  %193 = vmatmul.mubr.bf16.gmra.mrb[0].mxu0 %v155
  %v194 = vpop.f32.mrb[0].mxu0
  %v195 = vadd.f32 %v140, %v194
  %v196 = vpop.f32.mrb[0].mxu0
  %v197 = vpop.f32.mrb[0].mxu0
  %v198 = vadd.f32 %v140, %v197
  %v199 = vpop.f32.mrb[0].mxu0
  %200 = vmatprep.mubr.bf16.mxu0 0
  %201 = vmatmul.mubr.bf16.gmra.mrb[0].mxu0 %v158
  %v202 = vpop.f32.mrb[0].mxu0
  %v203 = vadd.f32 %v140, %v202
  %v204 = vpop.f32.mrb[0].mxu0
  %v205 = vpop.f32.mrb[0].mxu0
  %v206 = vadd.f32 %v140, %v205
  %v207 = vpop.f32.mrb[0].mxu0
  %208 = vdwg.mxu0
  %v209 = vmax.f32 %v195, 0.0
  %v210 = vmax.f32 %v198, 0.0
  %v211 = vmax.f32 %v203, 0.0
  %v212 = vmax.f32 %v206, 0.0
  %v213 = vpack.c.bf16 %v210, %v209
  %v214 = vpack.c.bf16 %v212, %v211
  %v217 = vunpack.c.l.b16 %v213
  %v218 = vunpack.c.h.b16 %v213
  %v219 = vunpack.c.l.b16 %v214
  %v220 = vunpack.c.h.b16 %v214
  %v221 = vpack.c.b16 %v217, %v217
  %v222 = vpack.c.b16 %v218, %v218
  %v223 = vpack.c.b16 %v219, %v219
  %v224 = vpack.c.b16 %v220, %v220
  %vm229 = vcmask 519168
  %230 = vst.msk [vmem:[%s5] sm:$0xf] %vm229, %v221
  %231 = vst.msk [vmem:[%s5 + $0x4] sm:$0xf] %vm229, %v222
  %232 = vst.msk [vmem:[%s5 + $0x8] sm:$0xf] %vm229, %v223
  %233 = vst.msk [vmem:[%s5 + $0xc] sm:$0xf] %vm229, %v224
  // Predicated region
  $region22: #{encoder_bottom_up_forward.18} parent=0 // pred_check
    _
  $region23: #{encoder_bottom_up_forward.18} parent=0 // pred_check_branch
    %235 = sbr.rel (0) target = $region25
  $region24: #{encoder_bottom_up_forward.18} parent=0 // pred_region
    _
  $region25: #{encoder_bottom_up_forward.18} parent=0 // pred_fallthru
    _
  // Predicated region
  $region26: #{encoder_bottom_up_forward.18} parent=0 // pred_check
    _
  $region27: #{encoder_bottom_up_forward.18} parent=0 // pred_check_branch
    %237 = sbr.rel (0) target = $region29
  $region28: #{encoder_bottom_up_forward.18} parent=0 // pred_region
    _
  $region29: #{encoder_bottom_up_forward.18} parent=0 // pred_fallthru
    _

// kernel: encoder_bottom_up_forward.25
$region0: #{encoder_bottom_up_forward.25}
  #allocation0 [shape = 'u32[]', space=smem, size = 0x4, offset = 0x4, fixed_abs, tag = 'smem constant byte address 0x4 - core index']
  #allocation1 [shape = 'u32[144,128]{1,0:T(1,128)}', space=vmem, size = 0x12000, scoped, tag = 'internal scratch']
  %s0 = inlined_call_operand.vmem [shape: f32[32,32], index: 0, kind: input, shape index: {}]
  %s1 = inlined_call_operand.vmem [shape: f32[1,32], index: 1, kind: input, shape index: {}]
  %s2 = inlined_call_operand.vmem [shape: f32[1,32], index: 2, kind: input, shape index: {}]
  %s3 = inlined_call_operand.hbm [shape: f32[32,32], index: 3, kind: output, shape index: {}]
  %s4 = sld [smem:[#allocation0]]
  $region22: #{encoder_bottom_up_forward.25} parent=0
    _
  %s6 = ssub.s32 1, %s4
  %s7 = scalar_select 0, %s6, %s4
  $region1: #{encoder_bottom_up_forward.25} parent=0
    #allocation2 [shape = 'u8[16384]{0}', space=vmem, size = 0x4000, scoped, tag = 'output window, operand 0, single buffered']
    #allocation3 [shape = 's32[1]{0}', space=sflag, size = 0x4, scoped, tag = 'scoped memory for encoder_bottom_up_forward.25']
    %8 = vsyncpa [#allocation3], 0
    // Predicated region
    $region2: #{encoder_bottom_up_forward.25} parent=1 // pred_check
      _
    $region3: #{encoder_bottom_up_forward.25} parent=1 // pred_check_branch
      %10 = sbr.rel (0) target = $region5
    $region4: #{encoder_bottom_up_forward.25} parent=1 // pred_region
      _
    $region5: #{encoder_bottom_up_forward.25} parent=1 // pred_fallthru
      _
    // Predicated region
    $region6: #{encoder_bottom_up_forward.25} parent=1 // pred_check
      _
    $region7: #{encoder_bottom_up_forward.25} parent=1 // pred_check_branch
      %12 = sbr.rel (0) target = $region9
    $region8: #{encoder_bottom_up_forward.25} parent=1 // pred_region
      _
    $region9: #{encoder_bottom_up_forward.25} parent=1 // pred_fallthru
      _
    // Predicated region
    $region10: #{encoder_bottom_up_forward.25} parent=1 // pred_check
      _
    $region11: #{encoder_bottom_up_forward.25} parent=1 // pred_check_branch
      %14 = sbr.rel (0) target = $region13
    $region12: #{encoder_bottom_up_forward.25} parent=1 // pred_region
      _
    $region13: #{encoder_bottom_up_forward.25} parent=1 // pred_fallthru
      _
    %v15 = vld [vmem:[%s0] sm:$0xff]
    %v16 = vld [vmem:[%s0 + $0x8] sm:$0xff]
    %v17 = vld [vmem:[%s0 + $0x10] sm:$0xff]
    %v18 = vld [vmem:[%s0 + $0x18] sm:$0xff]
    %vm19 = vcmask 261120
    %v20 = vsel %vm19, %v15, 0.0
    %21 = vadd.xlane.f32.xlu0 %v20
    %v22 = vpop.xlane.xlu0 %21
    %v23 = vsel %vm19, %v16, 0.0
    %24 = vadd.xlane.f32.xlu0 %v23
    %v25 = vpop.xlane.xlu0 %24
    %v26 = vsel %vm19, %v17, 0.0
    %27 = vadd.xlane.f32.xlu0 %v26
    %v28 = vpop.xlane.xlu0 %27
    %v29 = vsel %vm19, %v18, 0.0
    %30 = vadd.xlane.f32.xlu0 %v29
    %v31 = vpop.xlane.xlu0 %30
    %v32 = vrcp.pop 32.0
    %v33 = vmul.f32 %v22, %v32
    %v34 = vmul.f32 %v25, %v32
    %v35 = vmul.f32 %v28, %v32
    %v36 = vmul.f32 %v31, %v32
    %v37 = vsub.f32 %v15, %v33
    %v38 = vsub.f32 %v16, %v34
    %v39 = vsub.f32 %v17, %v35
    %v40 = vsub.f32 %v18, %v36
    %v41 = vmul.f32 %v37, %v37
    %v42 = vmul.f32 %v38, %v38
    %v43 = vmul.f32 %v39, %v39
    %v44 = vmul.f32 %v40, %v40
    %v45 = vsel %vm19, %v41, 0.0
    %46 = vadd.xlane.f32.xlu0 %v45
    %v47 = vpop.xlane.xlu0 %46
    %v48 = vsel %vm19, %v42, 0.0
    %49 = vadd.xlane.f32.xlu0 %v48
    %v50 = vpop.xlane.xlu0 %49
    %v51 = vsel %vm19, %v43, 0.0
    %52 = vadd.xlane.f32.xlu0 %v51
    %v53 = vpop.xlane.xlu0 %52
    %v54 = vsel %vm19, %v44, 0.0
    %55 = vadd.xlane.f32.xlu0 %v54
    %v56 = vpop.xlane.xlu0 %55
    %v57 = vmul.f32 %v47, 0.032258064
    %v58 = vmul.f32 %v50, 0.032258064
    %v59 = vmul.f32 %v53, 0.032258064
    %v60 = vmul.f32 %v56, 0.032258064
    %v61 = vrsqrt.pop %v57
    %v62 = vmul.f32 %v57, %v61
    %vm63 = vcmp.eq.f32.partialorder %v57, inf
    %v64 = vsel %vm63, %v57, %v62
    %vm65 = vcmp.eq.f32.partialorder %v57, 0.0
    %v66 = vand.u32 %v57, 2147483648
    %v67 = vsel %vm65, %v66, %v64
    %v68 = vrsqrt.pop %v58
    %v69 = vmul.f32 %v58, %v68
    %vm70 = vcmp.eq.f32.partialorder %v58, inf
    %v71 = vsel %vm70, %v58, %v69
    %vm72 = vcmp.eq.f32.partialorder %v58, 0.0
    %v73 = vand.u32 %v58, 2147483648
    %v74 = vsel %vm72, %v73, %v71
    %v75 = vrsqrt.pop %v59
    %v76 = vmul.f32 %v59, %v75
    %vm77 = vcmp.eq.f32.partialorder %v59, inf
    %v78 = vsel %vm77, %v59, %v76
    %vm79 = vcmp.eq.f32.partialorder %v59, 0.0
    %v80 = vand.u32 %v59, 2147483648
    %v81 = vsel %vm79, %v80, %v78
    %v82 = vrsqrt.pop %v60
    %v83 = vmul.f32 %v60, %v82
    %vm84 = vcmp.eq.f32.partialorder %v60, inf
    %v85 = vsel %vm84, %v60, %v83
    %vm86 = vcmp.eq.f32.partialorder %v60, 0.0
    %v87 = vand.u32 %v60, 2147483648
    %v88 = vsel %vm86, %v87, %v85
    %v89 = vadd.f32 %v67, 1e-06
    %v90 = vadd.f32 %v74, 1e-06
    %v91 = vadd.f32 %v81, 1e-06
    %v92 = vadd.f32 %v88, 1e-06
    %v93 = vrcp.pop %v89
    %v94 = vrcp.pop %v90
    %v95 = vrcp.pop %v91
    %v96 = vrcp.pop %v92
    %v97 = vld [vmem:[%s1] sm:$0x1]
    %v99 = vlaneseq
    %v100 = vshrl.u32 %v99, 7
    %v101 = vsub.s32 0, %v100
    %v102 = vrot.slane %v97, %v101
    %v104 = vmul.f32 %v102, %v37
    %v105 = vmul.f32 %v102, %v38
    %v106 = vmul.f32 %v102, %v39
    %v107 = vmul.f32 %v102, %v40
    %v108 = vmul.f32 %v104, %v93
    %v109 = vmul.f32 %v105, %v94
    %v110 = vmul.f32 %v106, %v95
    %v111 = vmul.f32 %v107, %v96
    %v112 = vld [vmem:[%s2] sm:$0x1]
    %v114 = vlaneseq
    %v115 = vshrl.u32 %v114, 7
    %v116 = vsub.s32 0, %v115
    %v117 = vrot.slane %v112, %v116
    %v119 = vadd.f32 %v108, %v117
    %v120 = vadd.f32 %v109, %v117
    %v121 = vadd.f32 %v110, %v117
    %v122 = vadd.f32 %v111, %v117
    %123 = vst.msk [vmem:[#allocation2] sm:$0xff] %vm19, %v119
    %124 = vst.msk [vmem:[#allocation2 + $0x8] sm:$0xff] %vm19, %v120
    %125 = vst.msk [vmem:[#allocation2 + $0x10] sm:$0xff] %vm19, %v121
    %126 = vst.msk [vmem:[#allocation2 + $0x18] sm:$0xff] %vm19, %v122
    // Predicated region
    $region14: #{encoder_bottom_up_forward.25} parent=1 // pred_check
      _
    $region15: #{encoder_bottom_up_forward.25} parent=1 // pred_check_branch
      %128 = sbr.rel (0) target = $region17
    $region16: #{encoder_bottom_up_forward.25} parent=1 // pred_region
      %s130 = ssub.s32 512, 512
      %131 = vsyncadd [#allocation3], %s130
      %s132 = sshll.u32 [#allocation2], 4
      %s133 = int_to_ptr.vmem [resolvable:$true] %s132
      %138 = dma.vmem_to_hbm [thread:$0]  %s133, 512, %s3, [#allocation3], 128, 128, 8
    $region17: #{encoder_bottom_up_forward.25} parent=1 // pred_fallthru
      _
    // Predicated region
    $region18: #{encoder_bottom_up_forward.25} parent=1 // pred_check
      _
    $region19: #{encoder_bottom_up_forward.25} parent=1 // pred_check_branch
      %140 = sbr.rel (0) target = $region21
    $region20: #{encoder_bottom_up_forward.25} parent=1 // pred_region
      %141 = dma.done [#allocation3], 512
    $region21: #{encoder_bottom_up_forward.25} parent=1 // pred_fallthru
      _
    %142 = vsyncpa [#allocation3], 1

</llo_original>
